<compile_context>
chip_gen: v5e
topology: v5e:2x2
jax: 0.10.0
libtpu: 0.0.40
codegen_flags: <defaults>
</compile_context>

<pallas_src>
import functools

import jax
import jax.numpy as jnp
from jax import lax
from jax.experimental import pallas as pl
from jax.experimental.pallas import tpu as pltpu


def _round_up(x, m):
    return (x + m - 1) // m * m


# Sub-pixel decomposition of ConvTranspose2d(k=3, s=2, p=1, output_padding=1):
# output phase (r, s) -> list of coarse-grid taps (u, v); weight tap is
# (kh, kw) = (r + 1 - 2u, s + 1 - 2v).
_CONVT_TAPS = {
    (0, 0): ((0, 0),),
    (0, 1): ((0, 0), (0, 1)),
    (1, 0): ((0, 0), (1, 0)),
    (1, 1): ((0, 0), (0, 1), (1, 0), (1, 1)),
}

# Canonical (phase_bit, coarse_offset) combos needed by the polyphase 3x3 conv
# on the upsampled grid.  Shared between weight packing and the kernel.
_ROWTAP = ((0, 0), (0, 1), (1, -1), (1, 0))


# ---------------------------------------------------------------------------
# Fused Pallas kernel: all four stages for Bblk images.
# Activations are (C, N) with N = Bblk * Lp, Lp = lane-padded (H+2)*(W+2).
# ---------------------------------------------------------------------------
def _upsample_kernel(x_ref, m_ref, w0_ref, w1_ref, wt_ref, w3_ref,
                     b01_ref, b23_ref, o_ref, tap_scr, act_scr,
                     *, wp, c2, nlanes):
    f32, bf16 = jnp.float32, jnp.bfloat16

    def leaky(y, alpha):
        return jnp.where(y >= 0.0, y, alpha * y)

    def roll(x, d):
        # xs[:, q] = x[:, (q + d) % N]  ->  roll by -d (XLU lane rotate).
        s = (-d) % nlanes
        if s == 0:
            return x
        return pltpu.roll(x, shift=s, axis=1)

    mask1 = m_ref[...]                                    # (1, N) interior mask
    maskc = jnp.broadcast_to(mask1, (c2, nlanes))         # hoisted once

    x = x_ref[...].astype(bf16)                           # (C, N)

    # ---- layer0: 1x1 conv (BN folded) + LReLU(0.01) --------------------------
    acc = jnp.dot(w0_ref[...], x, preferred_element_type=f32)
    x0 = maskc * leaky(acc + b01_ref[:, 0:1], 0.01)        # (C2, N) f32

    # ---- layer0_1: 3x3 conv p=1 : 9 rolled taps -> one (C2,72)@(72,N) dot ----
    for kh in range(3):
        for kw in range(3):
            k = kh * 3 + kw
            tap_scr[k * c2:(k + 1) * c2, :] = roll(x0, (kh - 1) * wp + (kw - 1))
    acc = jnp.dot(w1_ref[...], tap_scr[0:9 * c2, :].astype(bf16),
                  preferred_element_type=f32)
    x1 = maskc * leaky(acc + b01_ref[:, 1:2], 0.01)         # (C2, N) f32

    # ---- conv_t1: ConvT(3,s=2,p=1,op=1), 4-phase : one (32,32)@(32,N) dot ----
    for t, (u, v) in enumerate(((0, 0), (0, 1), (1, 0), (1, 1))):
        tap_scr[t * c2:(t + 1) * c2, :] = roll(x1, u * wp + v)
    acc = jnp.dot(wt_ref[...], tap_scr[0:4 * c2, :].astype(bf16),
                  preferred_element_type=f32)               # (4*C2, N): all phases
    yt = mask1 * leaky(acc + b23_ref[:, 0:1], 0.2)
    act_scr[...] = yt                                       # phases parked in VMEM

    # ---- layer1: 3x3 conv on fine grid (polyphase) : one (32,128)@(128,N) dot
    for ai, (rp, u) in enumerate(_ROWTAP):
        for bi, (sp, v) in enumerate(_ROWTAP):
            ph = 2 * rp + sp
            j = ai * 4 + bi
            src = act_scr[ph * c2:(ph + 1) * c2, :]
            tap_scr[j * c2:(j + 1) * c2, :] = roll(src, u * wp + v)
    acc = jnp.dot(w3_ref[...], tap_scr[...].astype(bf16),
                  preferred_element_type=f32)                # (4*C2, N)
    # no mask: wrapper slices the interior, pad-ring garbage is discarded
    o_ref[0] = leaky(acc + b23_ref[:, 1:2], 0.2).astype(o_ref.dtype)


# ---------------------------------------------------------------------------
# Forward wrapper
# ---------------------------------------------------------------------------
def upsample_layer_forward(x_nchw, kp):
    B, C, H, W = x_nchw.shape
    C2 = 2 * C
    Hp, Wp = H + 2, W + 2
    L = Hp * Wp
    Lp = _round_up(L, 128)                       # lane-dense per-image flat length

    # split batch over 2 parallel grid steps when possible (both v7x TCs busy),
    # packing Bblk images onto lanes per step (widened dot N dim).
    nb = 2 if (B % 2 == 0 and B >= 2) else 1
    Bblk = B // nb
    Nblk = Bblk * Lp

    # zero-pad spatial ring + lane padding, flatten plane onto lanes,
    # channel-major with image-major lane segments: (C, B*Lp)
    xp = jnp.pad(x_nchw, ((0, 0), (0, 0), (1, 1), (1, 1))).reshape(B, C, L)
    xp = jnp.pad(xp, ((0, 0), (0, 0), (0, Lp - L)))
    xp = jnp.transpose(xp, (1, 0, 2)).reshape(C, B * Lp)

    # interior mask (1 on real pixels, 0 on pad ring / lane padding), tiled per image
    m = jnp.pad(jnp.ones((H, W), jnp.float32), ((1, 1), (1, 1))).reshape(1, L)
    m = jnp.pad(m, ((0, 0), (0, Lp - L)))
    m = jnp.tile(m, (1, Bblk))                   # (1, Nblk)

    out = pl.pallas_call(
        functools.partial(_upsample_kernel, wp=Wp, c2=C2, nlanes=Nblk),
        out_shape=jax.ShapeDtypeStruct((nb, 4 * C2, Nblk), jnp.float32),
        grid_spec=pltpu.PrefetchScalarGridSpec(
            num_scalar_prefetch=0,
            grid=(nb,),
            in_specs=[
                pl.BlockSpec((C, Nblk), lambda g: (0, g)),            # x
                pl.BlockSpec((1, Nblk), lambda g: (0, 0)),            # mask
                pl.BlockSpec((C2, C), lambda g: (0, 0)),              # w0 (1x1)
                pl.BlockSpec((C2, 9 * C2), lambda g: (0, 0)),         # w1 fused
                pl.BlockSpec((4 * C2, 4 * C2), lambda g: (0, 0)),     # convT fused
                pl.BlockSpec((4 * C2, 16 * C2), lambda g: (0, 0)),    # w3 fused
                pl.BlockSpec((C2, 2), lambda g: (0, 0)),              # biases 0,1
                pl.BlockSpec((4 * C2, 2), lambda g: (0, 0)),          # biases 2,3
            ],
            out_specs=pl.BlockSpec((1, 4 * C2, Nblk), lambda g: (g, 0, 0)),
            scratch_shapes=[
                pltpu.VMEM((16 * C2, Nblk), jnp.float32),   # stacked conv taps
                pltpu.VMEM((4 * C2, Nblk), jnp.float32),    # conv_t phase acts
            ],
        ),
        compiler_params=pltpu.CompilerParams(
            dimension_semantics=("parallel",),
            vmem_limit_bytes=32 * 1024 * 1024,
        ),
    )(xp, m, kp["w0t"], kp["w1t"], kp["wtt"], kp["w3t"], kp["b01"], kp["b23"])

    # un-flatten, drop pad ring, interleave the 2x2 sub-pixel phases -> NCHW
    y = out.reshape(nb, 2, 2, C2, Bblk, Lp)[..., :L]
    y = y.reshape(nb, 2, 2, C2, Bblk, Hp, Wp)[..., 1:-1, 1:-1]
    y = jnp.transpose(y, (0, 4, 3, 5, 1, 6, 2)).reshape(B, C2, 2 * H, 2 * W)
    return y


# ---------------------------------------------------------------------------
# Parameter init (raw, deterministic) + one-time kernel-weight packing
# ---------------------------------------------------------------------------
def _bn_fold(key, c, eps=1e-5):
    k1, k2, k3, k4 = jax.random.split(key, 4)
    gamma = 1.0 + 0.1 * jax.random.normal(k1, (c,), jnp.float32)
    beta = 0.1 * jax.random.normal(k2, (c,), jnp.float32)
    mean = 0.05 * jax.random.normal(k3, (c,), jnp.float32)
    var = 1.0 + 0.1 * jax.random.uniform(k4, (c,), jnp.float32)
    scale = gamma / jnp.sqrt(var + eps)
    bias = beta - mean * scale
    return scale, bias


def init_params(key, in_channels):
    C, C2 = in_channels, 2 * in_channels
    ks = jax.random.split(key, 8)

    def conv_w(k, kh, kw, cin, cout):
        fan_in = kh * kw * cin
        return jax.random.normal(k, (kh, kw, cin, cout), jnp.float32) / jnp.sqrt(fan_in)

    p = {}
    p["w0"] = conv_w(ks[0], 1, 1, C, C2)                       # Conv2d(C, 2C, 1)
    p["s0"], p["b0"] = _bn_fold(ks[1], C2)
    p["w01"] = conv_w(ks[2], 3, 3, C2, C2)                     # Conv2d(2C, 2C, 3, p=1)
    p["s01"], p["b01"] = _bn_fold(ks[3], C2)
    p["wt"] = jax.random.normal(ks[4], (C2, C2, 3, 3), jnp.float32) / jnp.sqrt(9 * C2)
    p["st"], p["bt"] = _bn_fold(ks[5], C2)
    p["w1"] = conv_w(ks[6], 3, 3, C2, C2)                      # Conv2d(2C, 2C, 3, p=1)
    p["s1"], p["b1"] = _bn_fold(ks[7], C2)
    return p


def pack_kernel_params(p):
    """Fold BN scales into the weights, fuse per-tap weights along the
    contraction dim, and cast dot weights to bf16 (one-time prep)."""
    C2 = p["w0"].shape[-1]
    bf16 = jnp.bfloat16

    def tap_T(w_hwio, scale, kh, kw):          # -> (Cout, Cin), BN-scaled
        return w_hwio[kh, kw].T * scale[:, None]

    # layer0 (1x1)
    w0t = (p["w0"][0, 0].T * p["s0"][:, None]).astype(bf16)          # (C2, C)

    # layer0_1: taps concatenated along K -> (C2, 9*C2)
    w1t = jnp.concatenate(
        [tap_T(p["w01"], p["s01"], kh, kw) for kh in range(3) for kw in range(3)],
        axis=1).astype(bf16)

    # conv_t1: zero-padded block weight (4*C2, 4*C2); row block = phase 2r+s,
    # col block = coarse tap 2u+v
    wtt = jnp.zeros((4 * C2, 4 * C2), jnp.float32)
    for (r, s), taps in _CONVT_TAPS.items():
        for (u, v) in taps:
            kh, kw = r + 1 - 2 * u, s + 1 - 2 * v
            blk = p["wt"][:, :, kh, kw].T * p["st"][:, None]          # (Cout, Cin)
            pr, pc = (2 * r + s) * C2, (2 * u + v) * C2
            wtt = wtt.at[pr:pr + C2, pc:pc + C2].set(blk)
    wtt = wtt.astype(bf16)

    # layer1: (4*C2, 16*C2); col block = stacked shifted-phase slot a*4+b
    w3t = jnp.zeros((4 * C2, 16 * C2), jnp.float32)
    for r in range(2):
        for s in range(2):
            for dh in (-1, 0, 1):
                for dw in (-1, 0, 1):
                    rp, sp = (r + dh) & 1, (s + dw) & 1
                    u, v = (r + dh - rp) // 2, (s + dw - sp) // 2
                    ai, bi = _ROWTAP.index((rp, u)), _ROWTAP.index((sp, v))
                    blk = tap_T(p["w1"], p["s1"], dh + 1, dw + 1)
                    pr, pc = (2 * r + s) * C2, (ai * 4 + bi) * C2
                    w3t = w3t.at[pr:pr + C2, pc:pc + C2].set(blk)
    w3t = w3t.astype(bf16)

    b01 = jnp.stack([p["b0"], p["b01"]], axis=1)                      # (C2, 2) f32
    b23 = jnp.stack([jnp.tile(p["bt"], 4), jnp.tile(p["b1"], 4)], axis=1)  # (4*C2, 2)
    return {"w0t": w0t, "w1t": w1t, "wtt": wtt, "w3t": w3t, "b01": b01, "b23": b23}


# ---------------------------------------------------------------------------
# Pure-JAX reference (lax.conv_general_dilated) for a correctness sanity check
# ---------------------------------------------------------------------------
def _ref_forward(x_nchw, p):
    dn = ("NHWC", "HWIO", "NHWC")

    def block(x, w, s, b, alpha, padding, lhs_dil=None):
        pad = ([(padding, padding)] * 2) if lhs_dil is None else [(1, 2), (1, 2)]
        y = lax.conv_general_dilated(x, w, (1, 1), pad,
                                     lhs_dilation=lhs_dil, dimension_numbers=dn)
        y = y * s + b
        return jnp.where(y >= 0.0, y, alpha * y)

    x = jnp.transpose(x_nchw, (0, 2, 3, 1))
    x = block(x, p["w0"], p["s0"], p["b0"], 0.01, 0)
    x = block(x, p["w01"], p["s01"], p["b01"], 0.01, 1)
    w_eff = jnp.flip(p["wt"], axis=(2, 3)).transpose(2, 3, 0, 1)
    x = block(x, w_eff, p["st"], p["bt"], 0.2, 1, lhs_dil=(2, 2))
    x = block(x, p["w1"], p["s1"], p["b1"], 0.2, 1)
    return jnp.transpose(x, (0, 3, 1, 2))


if __name__ == "__main__":
    key = jax.random.PRNGKey(0)
    kx, kp = jax.random.split(key)

    B, C, H, W = 2, 4, 16, 16
    x = jax.random.normal(kx, (B, C, H, W), jnp.float32)
    params = init_params(kp, C)
    kparams = pack_kernel_params(params)        # one-time weight prep (hoisted)

    out = jax.jit(upsample_layer_forward)(x, kparams)
    out = jax.block_until_ready(out)

    assert out.shape == (B, 2 * C, 2 * H, 2 * W), out.shape

    ref = jax.block_until_ready(_ref_forward(x, params))
    # bf16 dot inputs (f32 accumulation) -> loosened tolerance vs f32 reference
    err = float(jnp.max(jnp.abs(out - ref)))
    assert jnp.allclose(out, ref, rtol=5e-2, atol=5e-2), err

    print("KERNEL_OK")
</pallas_src>

<mosaic_0001>
module attributes {stable_mosaic.version = 11 : i64} {
  func.func @_upsample_kernel(%arg0: i32, %arg1: memref<4x384xf32, #tpu.memory_space<vmem>>, %arg2: memref<1x384xf32, #tpu.memory_space<vmem>>, %arg3: memref<8x4xbf16, #tpu.memory_space<vmem>>, %arg4: memref<8x72xbf16, #tpu.memory_space<vmem>>, %arg5: memref<32x32xbf16, #tpu.memory_space<vmem>>, %arg6: memref<32x128xbf16, #tpu.memory_space<vmem>>, %arg7: memref<8x2xf32, #tpu.memory_space<vmem>>, %arg8: memref<32x2xf32, #tpu.memory_space<vmem>>, %arg9: memref<1x32x384xf32, #tpu.memory_space<vmem>>, %arg10: memref<128x384xf32, #tpu.memory_space<vmem>>, %arg11: memref<32x384xf32, #tpu.memory_space<vmem>>) attributes {dimension_semantics = [#tpu.dimension_semantics<parallel>], iteration_bounds = array<i64: 2>, scalar_prefetch = 0 : i64, scratch_operands = 2 : i64, tpu.core_type = #tpu.core_type<tc>, window_params = [{transform_indices = @transform_0, window_bounds = array<i64: 4, 384>}, {pipeline_mode = #tpu.pipeline_mode<synchronous>, transform_indices = @transform_1, window_bounds = array<i64: 1, 384>}, {pipeline_mode = #tpu.pipeline_mode<synchronous>, transform_indices = @transform_2, window_bounds = array<i64: 8, 4>}, {pipeline_mode = #tpu.pipeline_mode<synchronous>, transform_indices = @transform_3, window_bounds = array<i64: 8, 72>}, {pipeline_mode = #tpu.pipeline_mode<synchronous>, transform_indices = @transform_4, window_bounds = array<i64: 32, 32>}, {pipeline_mode = #tpu.pipeline_mode<synchronous>, transform_indices = @transform_5, window_bounds = array<i64: 32, 128>}, {pipeline_mode = #tpu.pipeline_mode<synchronous>, transform_indices = @transform_6, window_bounds = array<i64: 8, 2>}, {pipeline_mode = #tpu.pipeline_mode<synchronous>, transform_indices = @transform_7, window_bounds = array<i64: 32, 2>}, {transform_indices = @transform_8, window_bounds = array<i64: 1, 32, 384>}]} {
    %c0 = arith.constant 0 : index
    %c0_0 = arith.constant 0 : index
    %0 = vector.load %arg2[%c0, %c0_0] : memref<1x384xf32, #tpu.memory_space<vmem>>, vector<1x384xf32>
    %1 = vector.shape_cast %0 : vector<1x384xf32> to vector<1x384xf32>
    %2 = vector.broadcast %1 : vector<1x384xf32> to vector<8x384xf32>
    %c0_1 = arith.constant 0 : index
    %c0_2 = arith.constant 0 : index
    %3 = vector.load %arg1[%c0_1, %c0_2] : memref<4x384xf32, #tpu.memory_space<vmem>>, vector<4x384xf32>
    %4 = arith.truncf %3 : vector<4x384xf32> to vector<4x384xbf16>
    %c0_3 = arith.constant 0 : index
    %c0_4 = arith.constant 0 : index
    %5 = vector.load %arg3[%c0_3, %c0_4] : memref<8x4xbf16, #tpu.memory_space<vmem>>, vector<8x4xbf16>
    %cst = arith.constant dense<0.000000e+00> : vector<8x384xf32>
    %6 = tpu.matmul %5, %4, %cst {dimension_numbers = #tpu.dot_dimension_numbers<[1], [0], [0], [1], [0, 0, 1, 1], [], []>} : vector<8x4xbf16>, vector<4x384xbf16>, vector<8x384xf32> -> vector<8x384xf32>
    %c0_5 = arith.constant 0 : index
    %c0_6 = arith.constant 0 : index
    %7 = vector.load %arg7[%c0_5, %c0_6] : memref<8x2xf32, #tpu.memory_space<vmem>>, vector<8x1xf32>
    %8 = vector.broadcast %7 : vector<8x1xf32> to vector<8x384xf32>
    %9 = arith.addf %6, %8 : vector<8x384xf32>
    %cst_7 = arith.constant 0.000000e+00 : f32
    %10 = vector.broadcast %cst_7 : f32 to vector<8x384xf32>
    %11 = arith.cmpf oge, %9, %10 : vector<8x384xf32>
    %cst_8 = arith.constant 0.00999999977 : f32
    %12 = vector.broadcast %cst_8 : f32 to vector<8x384xf32>
    %13 = arith.mulf %12, %9 : vector<8x384xf32>
    %14 = arith.select %11, %9, %13 : vector<8x384xi1>, vector<8x384xf32>
    %15 = arith.mulf %2, %14 : vector<8x384xf32>
    %c19_i32 = arith.constant 19 : i32
    %16 = tpu.dynamic_rotate %15 by %c19_i32 dim 1 : vector<8x384xf32>, i32 -> vector<8x384xf32>
    %c0_9 = arith.constant 0 : index
    %c0_10 = arith.constant 0 : index
    %17 = vector.load %arg10[%c0_9, %c0_10] : memref<128x384xf32, #tpu.memory_space<vmem>>, vector<8x384xf32>
    tpu.vector_store %arg10[%c0_9, %c0_10], %16 {strides = array<i32>} : memref<128x384xf32, #tpu.memory_space<vmem>>, vector<8x384xf32>,
    %c18_i32 = arith.constant 18 : i32
    %18 = tpu.dynamic_rotate %15 by %c18_i32 dim 1 : vector<8x384xf32>, i32 -> vector<8x384xf32>
    %c8 = arith.constant 8 : index
    %c0_11 = arith.constant 0 : index
    %19 = vector.load %arg10[%c8, %c0_11] : memref<128x384xf32, #tpu.memory_space<vmem>>, vector<8x384xf32>
    tpu.vector_store %arg10[%c8, %c0_11], %18 {strides = array<i32>} : memref<128x384xf32, #tpu.memory_space<vmem>>, vector<8x384xf32>,
    %c17_i32 = arith.constant 17 : i32
    %20 = tpu.dynamic_rotate %15 by %c17_i32 dim 1 : vector<8x384xf32>, i32 -> vector<8x384xf32>
    %c16 = arith.constant 16 : index
    %c0_12 = arith.constant 0 : index
    %21 = vector.load %arg10[%c16, %c0_12] : memref<128x384xf32, #tpu.memory_space<vmem>>, vector<8x384xf32>
    tpu.vector_store %arg10[%c16, %c0_12], %20 {strides = array<i32>} : memref<128x384xf32, #tpu.memory_space<vmem>>, vector<8x384xf32>,
    %c1_i32 = arith.constant 1 : i32
    %22 = tpu.dynamic_rotate %15 by %c1_i32 dim 1 : vector<8x384xf32>, i32 -> vector<8x384xf32>
    %c24 = arith.constant 24 : index
    %c0_13 = arith.constant 0 : index
    %23 = vector.load %arg10[%c24, %c0_13] : memref<128x384xf32, #tpu.memory_space<vmem>>, vector<8x384xf32>
    tpu.vector_store %arg10[%c24, %c0_13], %22 {strides = array<i32>} : memref<128x384xf32, #tpu.memory_space<vmem>>, vector<8x384xf32>,
    %c32 = arith.constant 32 : index
    %c0_14 = arith.constant 0 : index
    %24 = vector.load %arg10[%c32, %c0_14] : memref<128x384xf32, #tpu.memory_space<vmem>>, vector<8x384xf32>
    tpu.vector_store %arg10[%c32, %c0_14], %15 {strides = array<i32>} : memref<128x384xf32, #tpu.memory_space<vmem>>, vector<8x384xf32>,
    %c383_i32 = arith.constant 383 : i32
    %25 = tpu.dynamic_rotate %15 by %c383_i32 dim 1 : vector<8x384xf32>, i32 -> vector<8x384xf32>
    %c40 = arith.constant 40 : index
    %c0_15 = arith.constant 0 : index
    %26 = vector.load %arg10[%c40, %c0_15] : memref<128x384xf32, #tpu.memory_space<vmem>>, vector<8x384xf32>
    tpu.vector_store %arg10[%c40, %c0_15], %25 {strides = array<i32>} : memref<128x384xf32, #tpu.memory_space<vmem>>, vector<8x384xf32>,
    %c367_i32 = arith.constant 367 : i32
    %27 = tpu.dynamic_rotate %15 by %c367_i32 dim 1 : vector<8x384xf32>, i32 -> vector<8x384xf32>
    %c48 = arith.constant 48 : index
    %c0_16 = arith.constant 0 : index
    %28 = vector.load %arg10[%c48, %c0_16] : memref<128x384xf32, #tpu.memory_space<vmem>>, vector<8x384xf32>
    tpu.vector_store %arg10[%c48, %c0_16], %27 {strides = array<i32>} : memref<128x384xf32, #tpu.memory_space<vmem>>, vector<8x384xf32>,
    %c366_i32 = arith.constant 366 : i32
    %29 = tpu.dynamic_rotate %15 by %c366_i32 dim 1 : vector<8x384xf32>, i32 -> vector<8x384xf32>
    %c56 = arith.constant 56 : index
    %c0_17 = arith.constant 0 : index
    %30 = vector.load %arg10[%c56, %c0_17] : memref<128x384xf32, #tpu.memory_space<vmem>>, vector<8x384xf32>
    tpu.vector_store %arg10[%c56, %c0_17], %29 {strides = array<i32>} : memref<128x384xf32, #tpu.memory_space<vmem>>, vector<8x384xf32>,
    %c365_i32 = arith.constant 365 : i32
    %31 = tpu.dynamic_rotate %15 by %c365_i32 dim 1 : vector<8x384xf32>, i32 -> vector<8x384xf32>
    %c64 = arith.constant 64 : index
    %c0_18 = arith.constant 0 : index
    %32 = vector.load %arg10[%c64, %c0_18] : memref<128x384xf32, #tpu.memory_space<vmem>>, vector<8x384xf32>
    tpu.vector_store %arg10[%c64, %c0_18], %31 {strides = array<i32>} : memref<128x384xf32, #tpu.memory_space<vmem>>, vector<8x384xf32>,
    %c0_19 = arith.constant 0 : index
    %c0_20 = arith.constant 0 : index
    %33 = vector.load %arg4[%c0_19, %c0_20] : memref<8x72xbf16, #tpu.memory_space<vmem>>, vector<8x72xbf16>
    %c0_21 = arith.constant 0 : index
    %c0_22 = arith.constant 0 : index
    %34 = vector.load %arg10[%c0_21, %c0_22] : memref<128x384xf32, #tpu.memory_space<vmem>>, vector<72x384xf32>
    %35 = arith.truncf %34 : vector<72x384xf32> to vector<72x384xbf16>
    %cst_23 = arith.constant dense<0.000000e+00> : vector<8x384xf32>
    %36 = tpu.matmul %33, %35, %cst_23 {dimension_numbers = #tpu.dot_dimension_numbers<[1], [0], [0], [1], [0, 0, 1, 1], [], []>} : vector<8x72xbf16>, vector<72x384xbf16>, vector<8x384xf32> -> vector<8x384xf32>
    %c0_24 = arith.constant 0 : index
    %c1 = arith.constant 1 : index
    %37 = vector.load %arg7[%c0_24, %c1] : memref<8x2xf32, #tpu.memory_space<vmem>>, vector<8x1xf32>
    %38 = vector.broadcast %37 : vector<8x1xf32> to vector<8x384xf32>
    %39 = arith.addf %36, %38 : vector<8x384xf32>
    %cst_25 = arith.constant 0.000000e+00 : f32
    %40 = vector.broadcast %cst_25 : f32 to vector<8x384xf32>
    %41 = arith.cmpf oge, %39, %40 : vector<8x384xf32>
    %cst_26 = arith.constant 0.00999999977 : f32
    %42 = vector.broadcast %cst_26 : f32 to vector<8x384xf32>
    %43 = arith.mulf %42, %39 : vector<8x384xf32>
    %44 = arith.select %41, %39, %43 : vector<8x384xi1>, vector<8x384xf32>
    %45 = arith.mulf %2, %44 : vector<8x384xf32>
    %c0_27 = arith.constant 0 : index
    %c0_28 = arith.constant 0 : index
    %46 = vector.load %arg10[%c0_27, %c0_28] : memref<128x384xf32, #tpu.memory_space<vmem>>, vector<8x384xf32>
    tpu.vector_store %arg10[%c0_27, %c0_28], %45 {strides = array<i32>} : memref<128x384xf32, #tpu.memory_space<vmem>>, vector<8x384xf32>,
    %c383_i32_29 = arith.constant 383 : i32
    %47 = tpu.dynamic_rotate %45 by %c383_i32_29 dim 1 : vector<8x384xf32>, i32 -> vector<8x384xf32>
    %c8_30 = arith.constant 8 : index
    %c0_31 = arith.constant 0 : index
    %48 = vector.load %arg10[%c8_30, %c0_31] : memref<128x384xf32, #tpu.memory_space<vmem>>, vector<8x384xf32>
    tpu.vector_store %arg10[%c8_30, %c0_31], %47 {strides = array<i32>} : memref<128x384xf32, #tpu.memory_space<vmem>>, vector<8x384xf32>,
    %c366_i32_32 = arith.constant 366 : i32
    %49 = tpu.dynamic_rotate %45 by %c366_i32_32 dim 1 : vector<8x384xf32>, i32 -> vector<8x384xf32>
    %c16_33 = arith.constant 16 : index
    %c0_34 = arith.constant 0 : index
    %50 = vector.load %arg10[%c16_33, %c0_34] : memref<128x384xf32, #tpu.memory_space<vmem>>, vector<8x384xf32>
    tpu.vector_store %arg10[%c16_33, %c0_34], %49 {strides = array<i32>} : memref<128x384xf32, #tpu.memory_space<vmem>>, vector<8x384xf32>,
    %c365_i32_35 = arith.constant 365 : i32
    %51 = tpu.dynamic_rotate %45 by %c365_i32_35 dim 1 : vector<8x384xf32>, i32 -> vector<8x384xf32>
    %c24_36 = arith.constant 24 : index
    %c0_37 = arith.constant 0 : index
    %52 = vector.load %arg10[%c24_36, %c0_37] : memref<128x384xf32, #tpu.memory_space<vmem>>, vector<8x384xf32>
    tpu.vector_store %arg10[%c24_36, %c0_37], %51 {strides = array<i32>} : memref<128x384xf32, #tpu.memory_space<vmem>>, vector<8x384xf32>,
    %c0_38 = arith.constant 0 : index
    %c0_39 = arith.constant 0 : index
    %53 = vector.load %arg5[%c0_38, %c0_39] : memref<32x32xbf16, #tpu.memory_space<vmem>>, vector<32x32xbf16>
    %c0_40 = arith.constant 0 : index
    %c0_41 = arith.constant 0 : index
    %54 = vector.load %arg10[%c0_40, %c0_41] : memref<128x384xf32, #tpu.memory_space<vmem>>, vector<32x384xf32>
    %55 = arith.truncf %54 : vector<32x384xf32> to vector<32x384xbf16>
    %cst_42 = arith.constant dense<0.000000e+00> : vector<32x384xf32>
    %56 = tpu.matmul %53, %55, %cst_42 {dimension_numbers = #tpu.dot_dimension_numbers<[1], [0], [0], [1], [0, 0, 1, 1], [], []>} : vector<32x32xbf16>, vector<32x384xbf16>, vector<32x384xf32> -> vector<32x384xf32>
    %c0_43 = arith.constant 0 : index
    %c0_44 = arith.constant 0 : index
    %57 = vector.load %arg8[%c0_43, %c0_44] : memref<32x2xf32, #tpu.memory_space<vmem>>, vector<32x1xf32>
    %58 = vector.broadcast %57 : vector<32x1xf32> to vector<32x384xf32>
    %59 = arith.addf %56, %58 : vector<32x384xf32>
    %cst_45 = arith.constant 0.000000e+00 : f32
    %60 = vector.broadcast %cst_45 : f32 to vector<32x384xf32>
    %61 = arith.cmpf oge, %59, %60 : vector<32x384xf32>
    %cst_46 = arith.constant 2.000000e-01 : f32
    %62 = vector.broadcast %cst_46 : f32 to vector<32x384xf32>
    %63 = arith.mulf %62, %59 : vector<32x384xf32>
    %64 = arith.select %61, %59, %63 : vector<32x384xi1>, vector<32x384xf32>
    %65 = vector.broadcast %0 : vector<1x384xf32> to vector<32x384xf32>
    %66 = arith.mulf %65, %64 : vector<32x384xf32>
    %c0_47 = arith.constant 0 : index
    %c0_48 = arith.constant 0 : index
    %67 = vector.load %arg11[%c0_47, %c0_48] : memref<32x384xf32, #tpu.memory_space<vmem>>, vector<32x384xf32>
    tpu.vector_store %arg11[%c0_47, %c0_48], %66 {strides = array<i32>} : memref<32x384xf32, #tpu.memory_space<vmem>>, vector<32x384xf32>,
    %c0_49 = arith.constant 0 : index
    %c0_50 = arith.constant 0 : index
    %68 = vector.load %arg11[%c0_49, %c0_50] : memref<32x384xf32, #tpu.memory_space<vmem>>, vector<8x384xf32>
    %c0_51 = arith.constant 0 : index
    %c0_52 = arith.constant 0 : index
    %69 = vector.load %arg10[%c0_51, %c0_52] : memref<128x384xf32, #tpu.memory_space<vmem>>, vector<8x384xf32>
    tpu.vector_store %arg10[%c0_51, %c0_52], %68 {strides = array<i32>} : memref<128x384xf32, #tpu.memory_space<vmem>>, vector<8x384xf32>,
    %c0_53 = arith.constant 0 : index
    %c0_54 = arith.constant 0 : index
    %70 = vector.load %arg11[%c0_53, %c0_54] : memref<32x384xf32, #tpu.memory_space<vmem>>, vector<8x384xf32>
    %c383_i32_55 = arith.constant 383 : i32
    %71 = tpu.dynamic_rotate %70 by %c383_i32_55 dim 1 : vector<8x384xf32>, i32 -> vector<8x384xf32>
    %c8_56 = arith.constant 8 : index
    %c0_57 = arith.constant 0 : index
    %72 = vector.load %arg10[%c8_56, %c0_57] : memref<128x384xf32, #tpu.memory_space<vmem>>, vector<8x384xf32>
    tpu.vector_store %arg10[%c8_56, %c0_57], %71 {strides = array<i32>} : memref<128x384xf32, #tpu.memory_space<vmem>>, vector<8x384xf32>,
    %c8_58 = arith.constant 8 : index
    %c0_59 = arith.constant 0 : index
    %73 = vector.load %arg11[%c8_58, %c0_59] : memref<32x384xf32, #tpu.memory_space<vmem>>, vector<8x384xf32>
    %c1_i32_60 = arith.constant 1 : i32
    %74 = tpu.dynamic_rotate %73 by %c1_i32_60 dim 1 : vector<8x384xf32>, i32 -> vector<8x384xf32>
    %c16_61 = arith.constant 16 : index
    %c0_62 = arith.constant 0 : index
    %75 = vector.load %arg10[%c16_61, %c0_62] : memref<128x384xf32, #tpu.memory_space<vmem>>, vector<8x384xf32>
    tpu.vector_store %arg10[%c16_61, %c0_62], %74 {strides = array<i32>} : memref<128x384xf32, #tpu.memory_space<vmem>>, vector<8x384xf32>,
    %c8_63 = arith.constant 8 : index
    %c0_64 = arith.constant 0 : index
    %76 = vector.load %arg11[%c8_63, %c0_64] : memref<32x384xf32, #tpu.memory_space<vmem>>, vector<8x384xf32>
    %c24_65 = arith.constant 24 : index
    %c0_66 = arith.constant 0 : index
    %77 = vector.load %arg10[%c24_65, %c0_66] : memref<128x384xf32, #tpu.memory_space<vmem>>, vector<8x384xf32>
    tpu.vector_store %arg10[%c24_65, %c0_66], %76 {strides = array<i32>} : memref<128x384xf32, #tpu.memory_space<vmem>>, vector<8x384xf32>,
    %c0_67 = arith.constant 0 : index
    %c0_68 = arith.constant 0 : index
    %78 = vector.load %arg11[%c0_67, %c0_68] : memref<32x384xf32, #tpu.memory_space<vmem>>, vector<8x384xf32>
    %c366_i32_69 = arith.constant 366 : i32
    %79 = tpu.dynamic_rotate %78 by %c366_i32_69 dim 1 : vector<8x384xf32>, i32 -> vector<8x384xf32>
    %c32_70 = arith.constant 32 : index
    %c0_71 = arith.constant 0 : index
    %80 = vector.load %arg10[%c32_70, %c0_71] : memref<128x384xf32, #tpu.memory_space<vmem>>, vector<8x384xf32>
    tpu.vector_store %arg10[%c32_70, %c0_71], %79 {strides = array<i32>} : memref<128x384xf32, #tpu.memory_space<vmem>>, vector<8x384xf32>,
    %c0_72 = arith.constant 0 : index
    %c0_73 = arith.constant 0 : index
    %81 = vector.load %arg11[%c0_72, %c0_73] : memref<32x384xf32, #tpu.memory_space<vmem>>, vector<8x384xf32>
    %c365_i32_74 = arith.constant 365 : i32
    %82 = tpu.dynamic_rotate %81 by %c365_i32_74 dim 1 : vector<8x384xf32>, i32 -> vector<8x384xf32>
    %c40_75 = arith.constant 40 : index
    %c0_76 = arith.constant 0 : index
    %83 = vector.load %arg10[%c40_75, %c0_76] : memref<128x384xf32, #tpu.memory_space<vmem>>, vector<8x384xf32>
    tpu.vector_store %arg10[%c40_75, %c0_76], %82 {strides = array<i32>} : memref<128x384xf32, #tpu.memory_space<vmem>>, vector<8x384xf32>,
    %c8_77 = arith.constant 8 : index
    %c0_78 = arith.constant 0 : index
    %84 = vector.load %arg11[%c8_77, %c0_78] : memref<32x384xf32, #tpu.memory_space<vmem>>, vector<8x384xf32>
    %c367_i32_79 = arith.constant 367 : i32
    %85 = tpu.dynamic_rotate %84 by %c367_i32_79 dim 1 : vector<8x384xf32>, i32 -> vector<8x384xf32>
    %c48_80 = arith.constant 48 : index
    %c0_81 = arith.constant 0 : index
    %86 = vector.load %arg10[%c48_80, %c0_81] : memref<128x384xf32, #tpu.memory_space<vmem>>, vector<8x384xf32>
    tpu.vector_store %arg10[%c48_80, %c0_81], %85 {strides = array<i32>} : memref<128x384xf32, #tpu.memory_space<vmem>>, vector<8x384xf32>,
    %c8_82 = arith.constant 8 : index
    %c0_83 = arith.constant 0 : index
    %87 = vector.load %arg11[%c8_82, %c0_83] : memref<32x384xf32, #tpu.memory_space<vmem>>, vector<8x384xf32>
    %c366_i32_84 = arith.constant 366 : i32
    %88 = tpu.dynamic_rotate %87 by %c366_i32_84 dim 1 : vector<8x384xf32>, i32 -> vector<8x384xf32>
    %c56_85 = arith.constant 56 : index
    %c0_86 = arith.constant 0 : index
    %89 = vector.load %arg10[%c56_85, %c0_86] : memref<128x384xf32, #tpu.memory_space<vmem>>, vector<8x384xf32>
    tpu.vector_store %arg10[%c56_85, %c0_86], %88 {strides = array<i32>} : memref<128x384xf32, #tpu.memory_space<vmem>>, vector<8x384xf32>,
    %c16_87 = arith.constant 16 : index
    %c0_88 = arith.constant 0 : index
    %90 = vector.load %arg11[%c16_87, %c0_88] : memref<32x384xf32, #tpu.memory_space<vmem>>, vector<8x384xf32>
    %c18_i32_89 = arith.constant 18 : i32
    %91 = tpu.dynamic_rotate %90 by %c18_i32_89 dim 1 : vector<8x384xf32>, i32 -> vector<8x384xf32>
    %c64_90 = arith.constant 64 : index
    %c0_91 = arith.constant 0 : index
    %92 = vector.load %arg10[%c64_90, %c0_91] : memref<128x384xf32, #tpu.memory_space<vmem>>, vector<8x384xf32>
    tpu.vector_store %arg10[%c64_90, %c0_91], %91 {strides = array<i32>} : memref<128x384xf32, #tpu.memory_space<vmem>>, vector<8x384xf32>,
    %c16_92 = arith.constant 16 : index
    %c0_93 = arith.constant 0 : index
    %93 = vector.load %arg11[%c16_92, %c0_93] : memref<32x384xf32, #tpu.memory_space<vmem>>, vector<8x384xf32>
    %c17_i32_94 = arith.constant 17 : i32
    %94 = tpu.dynamic_rotate %93 by %c17_i32_94 dim 1 : vector<8x384xf32>, i32 -> vector<8x384xf32>
    %c72 = arith.constant 72 : index
    %c0_95 = arith.constant 0 : index
    %95 = vector.load %arg10[%c72, %c0_95] : memref<128x384xf32, #tpu.memory_space<vmem>>, vector<8x384xf32>
    tpu.vector_store %arg10[%c72, %c0_95], %94 {strides = array<i32>} : memref<128x384xf32, #tpu.memory_space<vmem>>, vector<8x384xf32>,
    %c24_96 = arith.constant 24 : index
    %c0_97 = arith.constant 0 : index
    %96 = vector.load %arg11[%c24_96, %c0_97] : memref<32x384xf32, #tpu.memory_space<vmem>>, vector<8x384xf32>
    %c19_i32_98 = arith.constant 19 : i32
    %97 = tpu.dynamic_rotate %96 by %c19_i32_98 dim 1 : vector<8x384xf32>, i32 -> vector<8x384xf32>
    %c80 = arith.constant 80 : index
    %c0_99 = arith.constant 0 : index
    %98 = vector.load %arg10[%c80, %c0_99] : memref<128x384xf32, #tpu.memory_space<vmem>>, vector<8x384xf32>
    tpu.vector_store %arg10[%c80, %c0_99], %97 {strides = array<i32>} : memref<128x384xf32, #tpu.memory_space<vmem>>, vector<8x384xf32>,
    %c24_100 = arith.constant 24 : index
    %c0_101 = arith.constant 0 : index
    %99 = vector.load %arg11[%c24_100, %c0_101] : memref<32x384xf32, #tpu.memory_space<vmem>>, vector<8x384xf32>
    %c18_i32_102 = arith.constant 18 : i32
    %100 = tpu.dynamic_rotate %99 by %c18_i32_102 dim 1 : vector<8x384xf32>, i32 -> vector<8x384xf32>
    %c88 = arith.constant 88 : index
    %c0_103 = arith.constant 0 : index
    %101 = vector.load %arg10[%c88, %c0_103] : memref<128x384xf32, #tpu.memory_space<vmem>>, vector<8x384xf32>
    tpu.vector_store %arg10[%c88, %c0_103], %100 {strides = array<i32>} : memref<128x384xf32, #tpu.memory_space<vmem>>, vector<8x384xf32>,
    %c16_104 = arith.constant 16 : index
    %c0_105 = arith.constant 0 : index
    %102 = vector.load %arg11[%c16_104, %c0_105] : memref<32x384xf32, #tpu.memory_space<vmem>>, vector<8x384xf32>
    %c96 = arith.constant 96 : index
    %c0_106 = arith.constant 0 : index
    %103 = vector.load %arg10[%c96, %c0_106] : memref<128x384xf32, #tpu.memory_space<vmem>>, vector<8x384xf32>
    tpu.vector_store %arg10[%c96, %c0_106], %102 {strides = array<i32>} : memref<128x384xf32, #tpu.memory_space<vmem>>, vector<8x384xf32>,
    %c16_107 = arith.constant 16 : index
    %c0_108 = arith.constant 0 : index
    %104 = vector.load %arg11[%c16_107, %c0_108] : memref<32x384xf32, #tpu.memory_space<vmem>>, vector<8x384xf32>
    %c383_i32_109 = arith.constant 383 : i32
    %105 = tpu.dynamic_rotate %104 by %c383_i32_109 dim 1 : vector<8x384xf32>, i32 -> vector<8x384xf32>
    %c104 = arith.constant 104 : index
    %c0_110 = arith.constant 0 : index
    %106 = vector.load %arg10[%c104, %c0_110] : memref<128x384xf32, #tpu.memory_space<vmem>>, vector<8x384xf32>
    tpu.vector_store %arg10[%c104, %c0_110], %105 {strides = array<i32>} : memref<128x384xf32, #tpu.memory_space<vmem>>, vector<8x384xf32>,
    %c24_111 = arith.constant 24 : index
    %c0_112 = arith.constant 0 : index
    %107 = vector.load %arg11[%c24_111, %c0_112] : memref<32x384xf32, #tpu.memory_space<vmem>>, vector<8x384xf32>
    %c1_i32_113 = arith.constant 1 : i32
    %108 = tpu.dynamic_rotate %107 by %c1_i32_113 dim 1 : vector<8x384xf32>, i32 -> vector<8x384xf32>
    %c112 = arith.constant 112 : index
    %c0_114 = arith.constant 0 : index
    %109 = vector.load %arg10[%c112, %c0_114] : memref<128x384xf32, #tpu.memory_space<vmem>>, vector<8x384xf32>
    tpu.vector_store %arg10[%c112, %c0_114], %108 {strides = array<i32>} : memref<128x384xf32, #tpu.memory_space<vmem>>, vector<8x384xf32>,
    %c24_115 = arith.constant 24 : index
    %c0_116 = arith.constant 0 : index
    %110 = vector.load %arg11[%c24_115, %c0_116] : memref<32x384xf32, #tpu.memory_space<vmem>>, vector<8x384xf32>
    %c120 = arith.constant 120 : index
    %c0_117 = arith.constant 0 : index
    %111 = vector.load %arg10[%c120, %c0_117] : memref<128x384xf32, #tpu.memory_space<vmem>>, vector<8x384xf32>
    tpu.vector_store %arg10[%c120, %c0_117], %110 {strides = array<i32>} : memref<128x384xf32, #tpu.memory_space<vmem>>, vector<8x384xf32>,
    %c0_118 = arith.constant 0 : index
    %c0_119 = arith.constant 0 : index
    %112 = vector.load %arg6[%c0_118, %c0_119] : memref<32x128xbf16, #tpu.memory_space<vmem>>, vector<32x128xbf16>
    %c0_120 = arith.constant 0 : index
    %c0_121 = arith.constant 0 : index
    %113 = vector.load %arg10[%c0_120, %c0_121] : memref<128x384xf32, #tpu.memory_space<vmem>>, vector<128x384xf32>
    %114 = arith.truncf %113 : vector<128x384xf32> to vector<128x384xbf16>
    %cst_122 = arith.constant dense<0.000000e+00> : vector<32x384xf32>
    %115 = tpu.matmul %112, %114, %cst_122 {dimension_numbers = #tpu.dot_dimension_numbers<[1], [0], [0], [1], [0, 0, 1, 1], [], []>} : vector<32x128xbf16>, vector<128x384xbf16>, vector<32x384xf32> -> vector<32x384xf32>
    %c0_123 = arith.constant 0 : index
    %c1_124 = arith.constant 1 : index
    %116 = vector.load %arg8[%c0_123, %c1_124] : memref<32x2xf32, #tpu.memory_space<vmem>>, vector<32x1xf32>
    %117 = vector.broadcast %116 : vector<32x1xf32> to vector<32x384xf32>
    %118 = arith.addf %115, %117 : vector<32x384xf32>
    %cst_125 = arith.constant 0.000000e+00 : f32
    %119 = vector.broadcast %cst_125 : f32 to vector<32x384xf32>
    %120 = arith.cmpf oge, %118, %119 : vector<32x384xf32>
    %cst_126 = arith.constant 2.000000e-01 : f32
    %121 = vector.broadcast %cst_126 : f32 to vector<32x384xf32>
    %122 = arith.mulf %121, %118 : vector<32x384xf32>
    %123 = arith.select %120, %118, %122 : vector<32x384xi1>, vector<32x384xf32>
    %c0_127 = arith.constant 0 : index
    %c0_128 = arith.constant 0 : index
    %c0_129 = arith.constant 0 : index
    %124 = vector.load %arg9[%c0_127, %c0_128, %c0_129] : memref<1x32x384xf32, #tpu.memory_space<vmem>>, vector<1x32x384xf32>
    %125 = vector.shape_cast %124 : vector<1x32x384xf32> to vector<32x384xf32>
    %126 = vector.shape_cast %123 : vector<32x384xf32> to vector<1x32x384xf32>
    tpu.vector_store %arg9[%c0_127, %c0_128, %c0_129], %126 {strides = array<i32>} : memref<1x32x384xf32, #tpu.memory_space<vmem>>, vector<1x32x384xf32>,
    return
  }
  func.func @transform_0(%arg0: i32) -> (i32, i32) {
    %c0_i32 = arith.constant 0 : i32
    %c0_i32_0 = arith.constant 0 : i32
    return %c0_i32, %arg0 : i32, i32
  }
  func.func @transform_1(%arg0: i32) -> (i32, i32) {
    %c0_i32 = arith.constant 0 : i32
    %c0_i32_0 = arith.constant 0 : i32
    %c0_i32_1 = arith.constant 0 : i32
    return %c0_i32, %c0_i32_0 : i32, i32
  }
  func.func @transform_2(%arg0: i32) -> (i32, i32) {
    %c0_i32 = arith.constant 0 : i32
    %c0_i32_0 = arith.constant 0 : i32
    %c0_i32_1 = arith.constant 0 : i32
    return %c0_i32, %c0_i32_0 : i32, i32
  }
  func.func @transform_3(%arg0: i32) -> (i32, i32) {
    %c0_i32 = arith.constant 0 : i32
    %c0_i32_0 = arith.constant 0 : i32
    %c0_i32_1 = arith.constant 0 : i32
    return %c0_i32, %c0_i32_0 : i32, i32
  }
  func.func @transform_4(%arg0: i32) -> (i32, i32) {
    %c0_i32 = arith.constant 0 : i32
    %c0_i32_0 = arith.constant 0 : i32
    %c0_i32_1 = arith.constant 0 : i32
    return %c0_i32, %c0_i32_0 : i32, i32
  }
  func.func @transform_5(%arg0: i32) -> (i32, i32) {
    %c0_i32 = arith.constant 0 : i32
    %c0_i32_0 = arith.constant 0 : i32
    %c0_i32_1 = arith.constant 0 : i32
    return %c0_i32, %c0_i32_0 : i32, i32
  }
  func.func @transform_6(%arg0: i32) -> (i32, i32) {
    %c0_i32 = arith.constant 0 : i32
    %c0_i32_0 = arith.constant 0 : i32
    %c0_i32_1 = arith.constant 0 : i32
    return %c0_i32, %c0_i32_0 : i32, i32
  }
  func.func @transform_7(%arg0: i32) -> (i32, i32) {
    %c0_i32 = arith.constant 0 : i32
    %c0_i32_0 = arith.constant 0 : i32
    %c0_i32_1 = arith.constant 0 : i32
    return %c0_i32, %c0_i32_0 : i32, i32
  }
  func.func @transform_8(%arg0: i32) -> (i32, i32, i32) {
    %c0_i32 = arith.constant 0 : i32
    %c0_i32_0 = arith.constant 0 : i32
    %c0_i32_1 = arith.constant 0 : i32
    return %arg0, %c0_i32, %c0_i32_0 : i32, i32, i32
  }
}

</mosaic_0001>

<llo_original>
// kernel: upsample_layer_forward.1
$region0: #{upsample_layer_forward.1}
  #allocation0 [shape = 'u32[]', space=smem, size = 0x4, offset = 0x4, fixed_abs, tag = 'smem constant byte address 0x4 - core index']
  #allocation1 [shape = 'u32[72,128]{1,0:T(1,128)}', space=vmem, size = 0x9000, scoped, tag = 'internal scratch']
  #allocation2 [shape = 'f32[128,384]{1,0:T(8,128)}', space=vmem, size = 0x30000, scoped, tag = 'scratch operand']
  #allocation3 [shape = 'f32[32,384]{1,0:T(8,128)}', space=vmem, size = 0xc000, scoped, tag = 'scratch operand']
  %s0 = inlined_call_operand.vmem [shape: f32[4,768], index: 0, kind: input, shape index: {}]
  %s1 = inlined_call_operand.vmem [shape: f32[1,384], index: 1, kind: input, shape index: {}]
  %s2 = inlined_call_operand.vmem [shape: bf16[8,4], index: 2, kind: input, shape index: {}]
  %s3 = inlined_call_operand.vmem [shape: bf16[8,72], index: 3, kind: input, shape index: {}]
  %s4 = inlined_call_operand.vmem [shape: bf16[32,32], index: 4, kind: input, shape index: {}]
  %s5 = inlined_call_operand.vmem [shape: bf16[32,128], index: 5, kind: input, shape index: {}]
  %s6 = inlined_call_operand.vmem [shape: f32[8,2], index: 6, kind: input, shape index: {}]
  %s7 = inlined_call_operand.vmem [shape: f32[32,2], index: 7, kind: input, shape index: {}]
  %s8 = inlined_call_operand.vmem [shape: f32[2,32,384], index: 8, kind: output, shape index: {}]
  %s9 = sld [smem:[#allocation0]]
  $region65: #{upsample_layer_forward.1} parent=0
    _
  %s11 = ssub.s32 1, %s9
  %s12 = scalar_select 0, %s11, %s9
  loop: start=0, step=1, limit=4
  $region2: #{upsample_layer_forward.1} parent=0 // loop_pre_header
    _
  $region3: #{upsample_layer_forward.1} parent=0 // loop_header
    %s14 = sphi 0, %s18
    %p15 = scmp.ge.s32.totalorder %s14, 4
    %s24 = sphi 0, %s26
    %s27 = sphi 0, %s24
    %s28 = sphi 0, %s27
    %s44 = sphi 0, %s28
    %s48 = sphi 0, %s48
    %s50 = sphi 0, %s48
    %s51 = sphi 0, %s50
    %s65 = sphi 0, %s51
    %s69 = sphi 0, %s69
    %s71 = sphi 0, %s69
    %s72 = sphi 0, %s71
    %s86 = sphi 0, %s72
    %s90 = sphi 0, %s90
    %s92 = sphi 0, %s90
    %s93 = sphi 0, %s92
    %s107 = sphi 0, %s93
    %s111 = sphi 0, %s111
    %s113 = sphi 0, %s111
    %s114 = sphi 0, %s113
    %s128 = sphi 0, %s114
    %s132 = sphi 0, %s132
    %s134 = sphi 0, %s132
    %s135 = sphi 0, %s134
    %s149 = sphi 0, %s135
    %s153 = sphi 0, %s153
    %s155 = sphi 0, %s153
    %s156 = sphi 0, %s155
    %s170 = sphi 0, %s156
    %s174 = sphi 0, %s174
    %s176 = sphi 0, %s174
    %s177 = sphi 0, %s176
    %s191 = sphi 0, %s177
    %s197 = sphi 0, %s199
    %s200 = sphi 0, %s197
    %s201 = sphi 0, %s200
    %s217 = sphi 0, %s201
  $region4: #{upsample_layer_forward.1} parent=0 // loop_header_branch
    %17 = sbr.rel (%p15) target = $region8
  $region5: #{upsample_layer_forward.1} parent=0 // loop_body
    %s19 = ssub.s32 %s14, 1
    %s20 = ssub.s32 %s14, 2
    %s21 = sadd.s32 %s14, 1
    %s22 = ssub.s32 %s14, %s21
    %p23 = scmp.eq.s32.totalorder %s22, 0
    %s25 = sadd.s32 %s24, 1
    %s26 = scalar_select %p23, %s24, %s25
    %p29 = pneg %p23
    %p30 = scmp.eq.s32.totalorder %s14, 1
    %p31 = por %p29, %p30
    %p32 = scmp.ne.s32.totalorder %s24, %s27
    %p33 = scmp.eq.s32.totalorder %s14, 0
    %p34 = por %p32, %p33
    %p35 = scmp.ne.s32.totalorder %s24, %s27
    %p36 = scmp.eq.s32.totalorder %s19, 1
    %p37 = por %p35, %p36
    %p38 = scmp.ne.s32.totalorder %s27, %s28
    %p39 = scmp.eq.s32.totalorder %s19, 0
    %p40 = por %p38, %p39
    %p41 = scmp.ne.s32.totalorder %s27, %s28
    %p42 = scmp.eq.s32.totalorder %s20, 1
    %p43 = por %p41, %p42
    %p45 = scmp.ne.s32.totalorder %s28, %s44
    %p46 = scmp.eq.s32.totalorder %s20, 0
    %p47 = por %p45, %p46
    %s49 = sadd.s32 %s48, 1
    %p52 = scmp.eq.s32.totalorder %s14, 1
    %p53 = scmp.ne.s32.totalorder %s48, %s50
    %p54 = scmp.eq.s32.totalorder %s14, 0
    %p55 = por %p53, %p54
    %p56 = scmp.ne.s32.totalorder %s48, %s50
    %p57 = scmp.eq.s32.totalorder %s19, 1
    %p58 = por %p56, %p57
    %p59 = scmp.ne.s32.totalorder %s50, %s51
    %p60 = scmp.eq.s32.totalorder %s19, 0
    %p61 = por %p59, %p60
    %p62 = scmp.ne.s32.totalorder %s50, %s51
    %p63 = scmp.eq.s32.totalorder %s20, 1
    %p64 = por %p62, %p63
    %p66 = scmp.ne.s32.totalorder %s51, %s65
    %p67 = scmp.eq.s32.totalorder %s20, 0
    %p68 = por %p66, %p67
    %s70 = sadd.s32 %s69, 1
    %p73 = scmp.eq.s32.totalorder %s14, 1
    %p74 = scmp.ne.s32.totalorder %s69, %s71
    %p75 = scmp.eq.s32.totalorder %s14, 0
    %p76 = por %p74, %p75
    %p77 = scmp.ne.s32.totalorder %s69, %s71
    %p78 = scmp.eq.s32.totalorder %s19, 1
    %p79 = por %p77, %p78
    %p80 = scmp.ne.s32.totalorder %s71, %s72
    %p81 = scmp.eq.s32.totalorder %s19, 0
    %p82 = por %p80, %p81
    %p83 = scmp.ne.s32.totalorder %s71, %s72
    %p84 = scmp.eq.s32.totalorder %s20, 1
    %p85 = por %p83, %p84
    %p87 = scmp.ne.s32.totalorder %s72, %s86
    %p88 = scmp.eq.s32.totalorder %s20, 0
    %p89 = por %p87, %p88
    %s91 = sadd.s32 %s90, 1
    %p94 = scmp.eq.s32.totalorder %s14, 1
    %p95 = scmp.ne.s32.totalorder %s90, %s92
    %p96 = scmp.eq.s32.totalorder %s14, 0
    %p97 = por %p95, %p96
    %p98 = scmp.ne.s32.totalorder %s90, %s92
    %p99 = scmp.eq.s32.totalorder %s19, 1
    %p100 = por %p98, %p99
    %p101 = scmp.ne.s32.totalorder %s92, %s93
    %p102 = scmp.eq.s32.totalorder %s19, 0
    %p103 = por %p101, %p102
    %p104 = scmp.ne.s32.totalorder %s92, %s93
    %p105 = scmp.eq.s32.totalorder %s20, 1
    %p106 = por %p104, %p105
    %p108 = scmp.ne.s32.totalorder %s93, %s107
    %p109 = scmp.eq.s32.totalorder %s20, 0
    %p110 = por %p108, %p109
    %s112 = sadd.s32 %s111, 1
    %p115 = scmp.eq.s32.totalorder %s14, 1
    %p116 = scmp.ne.s32.totalorder %s111, %s113
    %p117 = scmp.eq.s32.totalorder %s14, 0
    %p118 = por %p116, %p117
    %p119 = scmp.ne.s32.totalorder %s111, %s113
    %p120 = scmp.eq.s32.totalorder %s19, 1
    %p121 = por %p119, %p120
    %p122 = scmp.ne.s32.totalorder %s113, %s114
    %p123 = scmp.eq.s32.totalorder %s19, 0
    %p124 = por %p122, %p123
    %p125 = scmp.ne.s32.totalorder %s113, %s114
    %p126 = scmp.eq.s32.totalorder %s20, 1
    %p127 = por %p125, %p126
    %p129 = scmp.ne.s32.totalorder %s114, %s128
    %p130 = scmp.eq.s32.totalorder %s20, 0
    %p131 = por %p129, %p130
    %s133 = sadd.s32 %s132, 1
    %p136 = scmp.eq.s32.totalorder %s14, 1
    %p137 = scmp.ne.s32.totalorder %s132, %s134
    %p138 = scmp.eq.s32.totalorder %s14, 0
    %p139 = por %p137, %p138
    %p140 = scmp.ne.s32.totalorder %s132, %s134
    %p141 = scmp.eq.s32.totalorder %s19, 1
    %p142 = por %p140, %p141
    %p143 = scmp.ne.s32.totalorder %s134, %s135
    %p144 = scmp.eq.s32.totalorder %s19, 0
    %p145 = por %p143, %p144
    %p146 = scmp.ne.s32.totalorder %s134, %s135
    %p147 = scmp.eq.s32.totalorder %s20, 1
    %p148 = por %p146, %p147
    %p150 = scmp.ne.s32.totalorder %s135, %s149
    %p151 = scmp.eq.s32.totalorder %s20, 0
    %p152 = por %p150, %p151
    %s154 = sadd.s32 %s153, 1
    %p157 = scmp.eq.s32.totalorder %s14, 1
    %p158 = scmp.ne.s32.totalorder %s153, %s155
    %p159 = scmp.eq.s32.totalorder %s14, 0
    %p160 = por %p158, %p159
    %p161 = scmp.ne.s32.totalorder %s153, %s155
    %p162 = scmp.eq.s32.totalorder %s19, 1
    %p163 = por %p161, %p162
    %p164 = scmp.ne.s32.totalorder %s155, %s156
    %p165 = scmp.eq.s32.totalorder %s19, 0
    %p166 = por %p164, %p165
    %p167 = scmp.ne.s32.totalorder %s155, %s156
    %p168 = scmp.eq.s32.totalorder %s20, 1
    %p169 = por %p167, %p168
    %p171 = scmp.ne.s32.totalorder %s156, %s170
    %p172 = scmp.eq.s32.totalorder %s20, 0
    %p173 = por %p171, %p172
    %s175 = sadd.s32 %s174, 1
    %p178 = scmp.eq.s32.totalorder %s14, 1
    %p179 = scmp.ne.s32.totalorder %s174, %s176
    %p180 = scmp.eq.s32.totalorder %s14, 0
    %p181 = por %p179, %p180
    %p182 = scmp.ne.s32.totalorder %s174, %s176
    %p183 = scmp.eq.s32.totalorder %s19, 1
    %p184 = por %p182, %p183
    %p185 = scmp.ne.s32.totalorder %s176, %s177
    %p186 = scmp.eq.s32.totalorder %s19, 0
    %p187 = por %p185, %p186
    %p188 = scmp.ne.s32.totalorder %s176, %s177
    %p189 = scmp.eq.s32.totalorder %s20, 1
    %p190 = por %p188, %p189
    %p192 = scmp.ne.s32.totalorder %s177, %s191
    %p193 = scmp.eq.s32.totalorder %s20, 0
    %p194 = por %p192, %p193
    %s195 = ssub.s32 %s14, %s21
    %p196 = scmp.eq.s32.totalorder %s195, 0
    %s198 = sadd.s32 %s197, 1
    %s199 = scalar_select %p196, %s197, %s198
    %p202 = pneg %p196
    %p203 = scmp.eq.s32.totalorder %s14, 1
    %p204 = por %p202, %p203
    %p205 = scmp.ne.s32.totalorder %s197, %s200
    %p206 = scmp.eq.s32.totalorder %s14, 0
    %p207 = por %p205, %p206
    %p208 = scmp.ne.s32.totalorder %s197, %s200
    %p209 = scmp.eq.s32.totalorder %s19, 1
    %p210 = por %p208, %p209
    %p211 = scmp.ne.s32.totalorder %s200, %s201
    %p212 = scmp.eq.s32.totalorder %s19, 0
    %p213 = por %p211, %p212
    %p214 = scmp.ne.s32.totalorder %s200, %s201
    %p215 = scmp.eq.s32.totalorder %s20, 1
    %p216 = por %p214, %p215
    %p218 = scmp.ne.s32.totalorder %s201, %s217
    %p219 = scmp.eq.s32.totalorder %s20, 0
    %p220 = por %p218, %p219
    %p221 = scmp.le.s32.totalorder 1, %s14
    %p222 = scmp.lt.s32.totalorder %s14, 3
    %p223 = pnand %p221, %p222
    %p224 = pneg %p223
    // Predicated region
    $region9: #{upsample_layer_forward.1} parent=5 // pred_check
      _
    $region10: #{upsample_layer_forward.1} parent=5 // pred_check_branch
      %226 = sbr.rel (%p223) target = $region12
    $region11: #{upsample_layer_forward.1} parent=5 // pred_region
      %s227 = ssub.s32 %s14, 1
      // Predicated region
      $region13: #{upsample_layer_forward.1} parent=11 // pred_check
        %p228 = pneg %p61
      $region14: #{upsample_layer_forward.1} parent=11 // pred_check_branch
        %230 = sbr.rel (%p228) target = $region16
      $region15: #{upsample_layer_forward.1} parent=11 // pred_region
        _
      $region16: #{upsample_layer_forward.1} parent=11 // pred_fallthru
        _
      // Predicated region
      $region17: #{upsample_layer_forward.1} parent=11 // pred_check
        %p231 = pneg %p82
      $region18: #{upsample_layer_forward.1} parent=11 // pred_check_branch
        %233 = sbr.rel (%p231) target = $region20
      $region19: #{upsample_layer_forward.1} parent=11 // pred_region
        _
      $region20: #{upsample_layer_forward.1} parent=11 // pred_fallthru
        _
      // Predicated region
      $region21: #{upsample_layer_forward.1} parent=11 // pred_check
        %p234 = pneg %p103
      $region22: #{upsample_layer_forward.1} parent=11 // pred_check_branch
        %236 = sbr.rel (%p234) target = $region24
      $region23: #{upsample_layer_forward.1} parent=11 // pred_region
        _
      $region24: #{upsample_layer_forward.1} parent=11 // pred_fallthru
        _
      // Predicated region
      $region25: #{upsample_layer_forward.1} parent=11 // pred_check
        %p237 = pneg %p124
      $region26: #{upsample_layer_forward.1} parent=11 // pred_check_branch
        %239 = sbr.rel (%p237) target = $region28
      $region27: #{upsample_layer_forward.1} parent=11 // pred_region
        _
      $region28: #{upsample_layer_forward.1} parent=11 // pred_fallthru
        _
      // Predicated region
      $region29: #{upsample_layer_forward.1} parent=11 // pred_check
        %p240 = pneg %p145
      $region30: #{upsample_layer_forward.1} parent=11 // pred_check_branch
        %242 = sbr.rel (%p240) target = $region32
      $region31: #{upsample_layer_forward.1} parent=11 // pred_region
        _
      $region32: #{upsample_layer_forward.1} parent=11 // pred_fallthru
        _
      // Predicated region
      $region33: #{upsample_layer_forward.1} parent=11 // pred_check
        %p243 = pneg %p166
      $region34: #{upsample_layer_forward.1} parent=11 // pred_check_branch
        %245 = sbr.rel (%p243) target = $region36
      $region35: #{upsample_layer_forward.1} parent=11 // pred_region
        _
      $region36: #{upsample_layer_forward.1} parent=11 // pred_fallthru
        _
      // Predicated region
      $region37: #{upsample_layer_forward.1} parent=11 // pred_check
        %p246 = pneg %p187
      $region38: #{upsample_layer_forward.1} parent=11 // pred_check_branch
        %248 = sbr.rel (%p246) target = $region40
      $region39: #{upsample_layer_forward.1} parent=11 // pred_region
        _
      $region40: #{upsample_layer_forward.1} parent=11 // pred_fallthru
        _
    $region12: #{upsample_layer_forward.1} parent=5 // pred_fallthru
      _
    %p249 = scmp.lt.s32.totalorder %s14, 2
    // Predicated region
    $region41: #{upsample_layer_forward.1} parent=5 // pred_check
      %p250 = pneg %p249
    $region42: #{upsample_layer_forward.1} parent=5 // pred_check_branch
      %252 = sbr.rel (%p250) target = $region44
    $region43: #{upsample_layer_forward.1} parent=5 // pred_region
      // Predicated region
      $region45: #{upsample_layer_forward.1} parent=43 // pred_check
        %p253 = pneg %p34
      $region46: #{upsample_layer_forward.1} parent=43 // pred_check_branch
        %255 = sbr.rel (%p253) target = $region48
      $region47: #{upsample_layer_forward.1} parent=43 // pred_region
        %s256 = smul.u32 3, %s14
        %p257 = scmp.lt.s32.totalorder %s256, 5
        %s258 = scalar_select %p257, %s256, 5
        %s259 = smul.addr %s258, 4
        %s260 = scalar_lea.vmem %s0, %s259
        %s261 = smul.u32 3, %s14
      $region48: #{upsample_layer_forward.1} parent=43 // pred_fallthru
        _
    $region44: #{upsample_layer_forward.1} parent=5 // pred_fallthru
      _
    %p262 = scmp.le.s32.totalorder 1, %s14
    %p263 = scmp.lt.s32.totalorder %s14, 3
    %p264 = pnand %p262, %p263
    %p265 = pneg %p264
    // Predicated region
    $region49: #{upsample_layer_forward.1} parent=5 // pred_check
      _
    $region50: #{upsample_layer_forward.1} parent=5 // pred_check_branch
      %267 = sbr.rel (%p264) target = $region52
    $region51: #{upsample_layer_forward.1} parent=5 // pred_region
      %s268 = ssub.s32 %s14, 1
      %s269 = smul.u32 3, %s19
      %p270 = scmp.lt.s32.totalorder %s269, 5
      %s271 = scalar_select %p270, %s269, 5
      %s272 = smul.addr %s271, 4
      %s273 = scalar_lea.vmem %s0, %s272
      %p274 = pneg %p40
      %p275 = pneg %p37
      %p276 = pneg %p61
      %p277 = pneg %p58
      %p278 = pneg %p82
      %p279 = pneg %p79
      %p280 = pneg %p103
      %p281 = pneg %p100
      %p282 = pneg %p124
      %p283 = pneg %p121
      %p284 = pneg %p145
      %p285 = pneg %p142
      %p286 = pneg %p166
      %p287 = pneg %p163
      %p288 = pneg %p187
      %p289 = pneg %p184
      %p290 = pneg %p213
      %p291 = pneg %p210
      %p292 = scmp.lt.s32.totalorder %s19, 1
      %s293 = scalar_select %p292, %s19, 1
      %s294 = smul.addr %s293, 12
      %s295 = smul.addr %s294, 8
      %s296 = scalar_lea.vmem %s8, %s295
      %s297 = smul.u32 3, %s19
      %p298 = scmp.lt.s32.totalorder %s297, 5
      %s299 = scalar_select %p298, %s297, 5
      %s300 = smul.addr %s299, 4
      %s301 = scalar_lea.vmem %s0, %s300
      %s302 = smul.u32 3, %s19
      %p303 = scmp.lt.s32.totalorder %s19, 1
      %s304 = scalar_select %p303, %s19, 1
      %s305 = smul.addr %s304, 12
      %s306 = smul.addr %s305, 8
      %s307 = scalar_lea.vmem %s8, %s306
      %v309 = vld [vmem:[%s1] sm:$0x7]
      %v311 = vperm.slane %v309, 0
      %v312 = vperm.slane %v309, 1
      %v313 = vperm.slane %v309, 2
      %v317 = vld [vmem:[%s301] sm:$0xff]
      %v318 = vld [vmem:[%s301 + $0x8] sm:$0xf]
      %321 = vst [vmem:[#allocation1] ss:$2 sm:$0xff] %v317
      %s322 = scalar_lea.vmem [#allocation1], 16
      %323 = vst [vmem:[%s322] ss:$2 sm:$0xff] %v318
      %v324 = vld.sshfl [vmem:[#allocation1] sm:$0xff pattern:$0x75316420]
      %v325 = vld.sshfl [vmem:[#allocation1 + $0x8] sm:$0xff pattern:$0x75316420]
      %v326 = vld.sshfl [vmem:[#allocation1 + $0x10] sm:$0xff pattern:$0x75316420]
      %v330 = vpack.c.bf16 %v324, %v324
      %v331 = vpack.c.bf16 %v325, %v325
      %v332 = vpack.c.bf16 %v326, %v326
      %v333 = vld [vmem:[%s2] sm:$0xf]
      %v334 = vld [vmem:[%s6] sm:$0xff]
      %336 = vset.pattern.permute.xlu0 0
      %337 = vperm.xlu0 %336, %v334
      %v338 = vpop.permute.xlu0 %337
      %vm340 = vcmask 31744
      %v342 = vsel %vm340, %v333, 0
      %vm344 = vcmask 1041408
      %v346 = vsel %vm344, %v330, 0
      %v349 = vsel %vm344, %v331, 0
      %v352 = vsel %vm344, %v332, 0
      %354 = vmatpush.bf16.msra.mxu0 0
      %355 = vmatpush.bf16.msra.mxu0 0
      %356 = vmatpush.bf16.msra.mxu0 0
      %357 = vmatpush.bf16.msra.mxu0 0
      %358 = vmatpush.bf16.msra.mxu0 0
      %359 = vmatpush.bf16.msra.mxu0 0
      %360 = vmatpush.bf16.msra.mxu0 0
      %361 = vmatpush.bf16.msra.mxu0 %v346
      %362 = vmatmul.bf16.gmra.mxu0 %v342
      %v363 = vpop.f32.mrf.mxu0
      %v364 = vadd.f32 %v338, %v363
      %v365 = vpop.f32.mrf.mxu0
      %366 = vdwg.mxu0
      %367 = vmatpush.bf16.msra.mxu0 0
      %368 = vmatpush.bf16.msra.mxu0 0
      %369 = vmatpush.bf16.msra.mxu0 0
      %370 = vmatpush.bf16.msra.mxu0 0
      %371 = vmatpush.bf16.msra.mxu0 0
      %372 = vmatpush.bf16.msra.mxu0 0
      %373 = vmatpush.bf16.msra.mxu0 0
      %374 = vmatpush.bf16.msra.mxu0 %v349
      %375 = vmatmul.bf16.gmra.mxu0 %v342
      %v376 = vpop.f32.mrf.mxu0
      %v377 = vadd.f32 %v338, %v376
      %v378 = vpop.f32.mrf.mxu0
      %379 = vdwg.mxu0
      %380 = vmatpush.bf16.msra.mxu0 0
      %381 = vmatpush.bf16.msra.mxu0 0
      %382 = vmatpush.bf16.msra.mxu0 0
      %383 = vmatpush.bf16.msra.mxu0 0
      %384 = vmatpush.bf16.msra.mxu0 0
      %385 = vmatpush.bf16.msra.mxu0 0
      %386 = vmatpush.bf16.msra.mxu0 0
      %387 = vmatpush.bf16.msra.mxu0 %v352
      %388 = vmatmul.bf16.gmra.mxu0 %v342
      %v389 = vpop.f32.mrf.mxu0
      %v390 = vadd.f32 %v338, %v389
      %v391 = vpop.f32.mrf.mxu0
      %392 = vdwg.mxu0
      %vm393 = vcmp.ge.f32.partialorder %v364, 0.0
      %vm394 = vcmp.ge.f32.partialorder %v377, 0.0
      %vm395 = vcmp.ge.f32.partialorder %v390, 0.0
      %v396 = vmul.f32 %v364, 0.01
      %v397 = vmul.f32 %v377, 0.01
      %v398 = vmul.f32 %v390, 0.01
      %v399 = vsel %vm393, %v364, %v396
      %v400 = vsel %vm394, %v377, %v397
      %v401 = vsel %vm395, %v390, %v398
      %v402 = vmul.f32 %v311, %v399
      %v403 = vmul.f32 %v312, %v400
      %v404 = vmul.f32 %v313, %v401
      %405 = vrot.lane.b32.xlu0 %v402, 19
      %v406 = vpop.permute.xlu0 %405
      %407 = vrot.lane.b32.xlu0 %v403, 19
      %v408 = vpop.permute.xlu0 %407
      %409 = vrot.lane.b32.xlu0 %v404, 19
      %v410 = vpop.permute.xlu0 %409
      %v411 = vlaneseq
      %v412 = vand.u32 %v411, 127
      %vm413 = vcmp.lt.s32.totalorder %v412, 19
      %v414 = vsel %vm413, %v408, %v410
      %v415 = vsel %vm413, %v406, %v408
      %v416 = vsel %vm413, %v410, %v406
      %417 = vst [vmem:[#allocation2] sm:$0xff] %v416
      %418 = vst [vmem:[#allocation2 + $0x8] sm:$0xff] %v415
      %419 = vst [vmem:[#allocation2 + $0x10] sm:$0xff] %v414
      %420 = vrot.lane.b32.xlu0 %v402, 18
      %v421 = vpop.permute.xlu0 %420
      %422 = vrot.lane.b32.xlu0 %v403, 18
      %v423 = vpop.permute.xlu0 %422
      %424 = vrot.lane.b32.xlu0 %v404, 18
      %v425 = vpop.permute.xlu0 %424
      %vm426 = vcmp.lt.s32.totalorder %v412, 18
      %v427 = vsel %vm426, %v423, %v425
      %v428 = vsel %vm426, %v421, %v423
      %v429 = vsel %vm426, %v425, %v421
      %430 = vst [vmem:[#allocation2 + $0x18] sm:$0xff] %v429
      %431 = vst [vmem:[#allocation2 + $0x20] sm:$0xff] %v428
      %432 = vst [vmem:[#allocation2 + $0x28] sm:$0xff] %v427
      %433 = vrot.lane.b32.xlu0 %v402, 17
      %v434 = vpop.permute.xlu0 %433
      %435 = vrot.lane.b32.xlu0 %v403, 17
      %v436 = vpop.permute.xlu0 %435
      %437 = vrot.lane.b32.xlu0 %v404, 17
      %v438 = vpop.permute.xlu0 %437
      %vm439 = vcmp.lt.s32.totalorder %v412, 17
      %v440 = vsel %vm439, %v436, %v438
      %v441 = vsel %vm439, %v434, %v436
      %v442 = vsel %vm439, %v438, %v434
      %443 = vst [vmem:[#allocation2 + $0x30] sm:$0xff] %v442
      %444 = vst [vmem:[#allocation2 + $0x38] sm:$0xff] %v441
      %445 = vst [vmem:[#allocation2 + $0x40] sm:$0xff] %v440
      %446 = vrot.lane.b32.xlu0 %v402, 1
      %v447 = vpop.permute.xlu0 %446
      %448 = vrot.lane.b32.xlu0 %v403, 1
      %v449 = vpop.permute.xlu0 %448
      %450 = vrot.lane.b32.xlu0 %v404, 1
      %v451 = vpop.permute.xlu0 %450
      %vm452 = vcmp.lt.s32.totalorder %v412, 1
      %v453 = vsel %vm452, %v449, %v451
      %v454 = vsel %vm452, %v447, %v449
      %v455 = vsel %vm452, %v451, %v447
      %456 = vst [vmem:[#allocation2 + $0x48] sm:$0xff] %v455
      %457 = vst [vmem:[#allocation2 + $0x50] sm:$0xff] %v454
      %458 = vst [vmem:[#allocation2 + $0x58] sm:$0xff] %v453
      %459 = vst [vmem:[#allocation2 + $0x60] sm:$0xff] %v402
      %460 = vst [vmem:[#allocation2 + $0x68] sm:$0xff] %v403
      %461 = vst [vmem:[#allocation2 + $0x70] sm:$0xff] %v404
      %462 = vrot.lane.b32.xlu0 %v402, 127
      %v463 = vpop.permute.xlu0 %462
      %464 = vrot.lane.b32.xlu0 %v403, 127
      %v465 = vpop.permute.xlu0 %464
      %466 = vrot.lane.b32.xlu0 %v404, 127
      %v467 = vpop.permute.xlu0 %466
      %vm468 = vcmp.lt.s32.totalorder %v412, 127
      %v469 = vsel %vm468, %v465, %v467
      %v470 = vsel %vm468, %v463, %v465
      %v471 = vsel %vm468, %v467, %v463
      %472 = vst [vmem:[#allocation2 + $0x78] sm:$0xff] %v470
      %473 = vst [vmem:[#allocation2 + $0x80] sm:$0xff] %v469
      %474 = vst [vmem:[#allocation2 + $0x88] sm:$0xff] %v471
      %475 = vrot.lane.b32.xlu0 %v402, 111
      %v476 = vpop.permute.xlu0 %475
      %477 = vrot.lane.b32.xlu0 %v403, 111
      %v478 = vpop.permute.xlu0 %477
      %479 = vrot.lane.b32.xlu0 %v404, 111
      %v480 = vpop.permute.xlu0 %479
      %vm481 = vcmp.lt.s32.totalorder %v412, 111
      %v482 = vsel %vm481, %v478, %v480
      %v483 = vsel %vm481, %v476, %v478
      %v484 = vsel %vm481, %v480, %v476
      %485 = vst [vmem:[#allocation2 + $0x90] sm:$0xff] %v483
      %486 = vst [vmem:[#allocation2 + $0x98] sm:$0xff] %v482
      %487 = vst [vmem:[#allocation2 + $0xa0] sm:$0xff] %v484
      %488 = vrot.lane.b32.xlu0 %v402, 110
      %v489 = vpop.permute.xlu0 %488
      %490 = vrot.lane.b32.xlu0 %v403, 110
      %v491 = vpop.permute.xlu0 %490
      %492 = vrot.lane.b32.xlu0 %v404, 110
      %v493 = vpop.permute.xlu0 %492
      %vm494 = vcmp.lt.s32.totalorder %v412, 110
      %v495 = vsel %vm494, %v491, %v493
      %v496 = vsel %vm494, %v489, %v491
      %v497 = vsel %vm494, %v493, %v489
      %498 = vst [vmem:[#allocation2 + $0xa8] sm:$0xff] %v496
      %499 = vst [vmem:[#allocation2 + $0xb0] sm:$0xff] %v495
      %500 = vst [vmem:[#allocation2 + $0xb8] sm:$0xff] %v497
      %501 = vrot.lane.b32.xlu0 %v402, 109
      %v502 = vpop.permute.xlu0 %501
      %503 = vrot.lane.b32.xlu0 %v403, 109
      %v504 = vpop.permute.xlu0 %503
      %505 = vrot.lane.b32.xlu0 %v404, 109
      %v506 = vpop.permute.xlu0 %505
      %vm507 = vcmp.lt.s32.totalorder %v412, 109
      %v508 = vsel %vm507, %v504, %v506
      %v509 = vsel %vm507, %v502, %v504
      %v510 = vsel %vm507, %v506, %v502
      %511 = vst [vmem:[#allocation2 + $0xc0] sm:$0xff] %v509
      %512 = vst [vmem:[#allocation2 + $0xc8] sm:$0xff] %v508
      %513 = vst [vmem:[#allocation2 + $0xd0] sm:$0xff] %v510
      %v514 = vld [vmem:[%s3] sm:$0xf]
      %v515 = vld [vmem:[#allocation2] sm:$0xff]
      %v516 = vld [vmem:[#allocation2 + $0x8] sm:$0xff]
      %v517 = vld [vmem:[#allocation2 + $0x10] sm:$0xff]
      %v518 = vld [vmem:[#allocation2 + $0x18] sm:$0xff]
      %v519 = vld [vmem:[#allocation2 + $0x20] sm:$0xff]
      %v520 = vld [vmem:[#allocation2 + $0x28] sm:$0xff]
      %v521 = vld [vmem:[#allocation2 + $0x30] sm:$0xff]
      %v522 = vld [vmem:[#allocation2 + $0x38] sm:$0xff]
      %v523 = vld [vmem:[#allocation2 + $0x40] sm:$0xff]
      %v524 = vld [vmem:[#allocation2 + $0x48] sm:$0xff]
      %v525 = vld [vmem:[#allocation2 + $0x50] sm:$0xff]
      %v526 = vld [vmem:[#allocation2 + $0x58] sm:$0xff]
      %v527 = vld [vmem:[#allocation2 + $0x60] sm:$0xff]
      %v528 = vld [vmem:[#allocation2 + $0x68] sm:$0xff]
      %v529 = vld [vmem:[#allocation2 + $0x70] sm:$0xff]
      %v530 = vld [vmem:[#allocation2 + $0x78] sm:$0xff]
      %v531 = vld [vmem:[#allocation2 + $0x80] sm:$0xff]
      %v532 = vld [vmem:[#allocation2 + $0x88] sm:$0xff]
      %v533 = vld [vmem:[#allocation2 + $0x90] sm:$0xff]
      %v534 = vld [vmem:[#allocation2 + $0x98] sm:$0xff]
      %v535 = vld [vmem:[#allocation2 + $0xa0] sm:$0xff]
      %v536 = vld [vmem:[#allocation2 + $0xa8] sm:$0xff]
      %v537 = vld [vmem:[#allocation2 + $0xb0] sm:$0xff]
      %v538 = vld [vmem:[#allocation2 + $0xb8] sm:$0xff]
      %v539 = vld [vmem:[#allocation2 + $0xc0] sm:$0xff]
      %v540 = vld [vmem:[#allocation2 + $0xc8] sm:$0xff]
      %v541 = vld [vmem:[#allocation2 + $0xd0] sm:$0xff]
      %v542 = vpack.c.bf16 %v518, %v515
      %v543 = vpack.c.bf16 %v519, %v516
      %v544 = vpack.c.bf16 %v520, %v517
      %v545 = vpack.c.bf16 %v524, %v521
      %v546 = vpack.c.bf16 %v525, %v522
      %v547 = vpack.c.bf16 %v526, %v523
      %v548 = vpack.c.bf16 %v530, %v527
      %v549 = vpack.c.bf16 %v531, %v528
      %v550 = vpack.c.bf16 %v532, %v529
      %v551 = vpack.c.bf16 %v536, %v533
      %v552 = vpack.c.bf16 %v537, %v534
      %v553 = vpack.c.bf16 %v538, %v535
      %v554 = vpack.c.bf16 %v539, %v539
      %v555 = vpack.c.bf16 %v540, %v540
      %v556 = vpack.c.bf16 %v541, %v541
      %v557 = vld [vmem:[%s6] sm:$0xff]
      %559 = vset.pattern.permute.xlu0 1
      %560 = vperm.xlu0 %559, %v557
      %v561 = vpop.permute.xlu0 %560
      %vm563 = vcmask 588800
      %v565 = vsel %vm563, %v514, 0
      %vm567 = vcmask 1043456
      %v569 = vsel %vm567, %v554, 0
      %v572 = vsel %vm567, %v555, 0
      %v575 = vsel %vm567, %v556, 0
      %577 = vmatpush.bf16.msra.mxu0 0
      %578 = vmatpush.bf16.msra.mxu0 0
      %579 = vmatpush.bf16.msra.mxu0 0
      %580 = vmatpush.bf16.msra.mxu0 %v569
      %581 = vmatpush.bf16.msra.mxu0 %v551
      %582 = vmatpush.bf16.msra.mxu0 %v548
      %583 = vmatpush.bf16.msra.mxu0 %v545
      %584 = vmatpush.bf16.msra.mxu0 %v542
      %585 = vmatmul.bf16.gmra.mxu0 %v565
      %v586 = vpop.f32.mrf.mxu0
      %v587 = vadd.f32 %v561, %v586
      %v588 = vpop.f32.mrf.mxu0
      %589 = vdwg.mxu0
      %590 = vmatpush.bf16.msra.mxu0 0
      %591 = vmatpush.bf16.msra.mxu0 0
      %592 = vmatpush.bf16.msra.mxu0 0
      %593 = vmatpush.bf16.msra.mxu0 %v572
      %594 = vmatpush.bf16.msra.mxu0 %v552
      %595 = vmatpush.bf16.msra.mxu0 %v549
      %596 = vmatpush.bf16.msra.mxu0 %v546
      %597 = vmatpush.bf16.msra.mxu0 %v543
      %598 = vmatmul.bf16.gmra.mxu0 %v565
      %v599 = vpop.f32.mrf.mxu0
      %v600 = vadd.f32 %v561, %v599
      %v601 = vpop.f32.mrf.mxu0
      %602 = vdwg.mxu0
      %603 = vmatpush.bf16.msra.mxu0 0
      %604 = vmatpush.bf16.msra.mxu0 0
      %605 = vmatpush.bf16.msra.mxu0 0
      %606 = vmatpush.bf16.msra.mxu0 %v575
      %607 = vmatpush.bf16.msra.mxu0 %v553
      %608 = vmatpush.bf16.msra.mxu0 %v550
      %609 = vmatpush.bf16.msra.mxu0 %v547
      %610 = vmatpush.bf16.msra.mxu0 %v544
      %611 = vmatmul.bf16.gmra.mxu0 %v565
      %v612 = vpop.f32.mrf.mxu0
      %v613 = vadd.f32 %v561, %v612
      %v614 = vpop.f32.mrf.mxu0
      %615 = vdwg.mxu0
      %vm616 = vcmp.ge.f32.partialorder %v587, 0.0
      %vm617 = vcmp.ge.f32.partialorder %v600, 0.0
      %vm618 = vcmp.ge.f32.partialorder %v613, 0.0
      %v619 = vmul.f32 %v587, 0.01
      %v620 = vmul.f32 %v600, 0.01
      %v621 = vmul.f32 %v613, 0.01
      %v622 = vsel %vm616, %v587, %v619
      %v623 = vsel %vm617, %v600, %v620
      %v624 = vsel %vm618, %v613, %v621
      %v625 = vmul.f32 %v311, %v622
      %v626 = vmul.f32 %v312, %v623
      %v627 = vmul.f32 %v313, %v624
      %628 = vst [vmem:[#allocation2] sm:$0xff] %v625
      %629 = vst [vmem:[#allocation2 + $0x8] sm:$0xff] %v626
      %630 = vst [vmem:[#allocation2 + $0x10] sm:$0xff] %v627
      %631 = vrot.lane.b32.xlu0 %v625, 127
      %v632 = vpop.permute.xlu0 %631
      %633 = vrot.lane.b32.xlu0 %v626, 127
      %v634 = vpop.permute.xlu0 %633
      %635 = vrot.lane.b32.xlu0 %v627, 127
      %v636 = vpop.permute.xlu0 %635
      %v637 = vsel %vm468, %v634, %v636
      %v638 = vsel %vm468, %v632, %v634
      %v639 = vsel %vm468, %v636, %v632
      %640 = vst [vmem:[#allocation2 + $0x18] sm:$0xff] %v638
      %641 = vst [vmem:[#allocation2 + $0x20] sm:$0xff] %v637
      %642 = vst [vmem:[#allocation2 + $0x28] sm:$0xff] %v639
      %643 = vrot.lane.b32.xlu0 %v625, 110
      %v644 = vpop.permute.xlu0 %643
      %645 = vrot.lane.b32.xlu0 %v626, 110
      %v646 = vpop.permute.xlu0 %645
      %647 = vrot.lane.b32.xlu0 %v627, 110
      %v648 = vpop.permute.xlu0 %647
      %v649 = vsel %vm494, %v646, %v648
      %v650 = vsel %vm494, %v644, %v646
      %v651 = vsel %vm494, %v648, %v644
      %652 = vst [vmem:[#allocation2 + $0x30] sm:$0xff] %v650
      %653 = vst [vmem:[#allocation2 + $0x38] sm:$0xff] %v649
      %654 = vst [vmem:[#allocation2 + $0x40] sm:$0xff] %v651
      %655 = vrot.lane.b32.xlu0 %v625, 109
      %v656 = vpop.permute.xlu0 %655
      %657 = vrot.lane.b32.xlu0 %v626, 109
      %v658 = vpop.permute.xlu0 %657
      %659 = vrot.lane.b32.xlu0 %v627, 109
      %v660 = vpop.permute.xlu0 %659
      %v661 = vsel %vm507, %v658, %v660
      %v662 = vsel %vm507, %v656, %v658
      %v663 = vsel %vm507, %v660, %v656
      %664 = vst [vmem:[#allocation2 + $0x48] sm:$0xff] %v662
      %665 = vst [vmem:[#allocation2 + $0x50] sm:$0xff] %v661
      %666 = vst [vmem:[#allocation2 + $0x58] sm:$0xff] %v663
      %v667 = vld [vmem:[%s4] sm:$0xf]
      %v668 = vld [vmem:[%s4 + $0x4] sm:$0xf]
      %v669 = vld [vmem:[%s4 + $0x8] sm:$0xf]
      %v670 = vld [vmem:[%s4 + $0xc] sm:$0xf]
      %v671 = vld [vmem:[#allocation2] sm:$0xff]
      %v672 = vld [vmem:[#allocation2 + $0x8] sm:$0xff]
      %v673 = vld [vmem:[#allocation2 + $0x10] sm:$0xff]
      %v674 = vld [vmem:[#allocation2 + $0x18] sm:$0xff]
      %v675 = vld [vmem:[#allocation2 + $0x20] sm:$0xff]
      %v676 = vld [vmem:[#allocation2 + $0x28] sm:$0xff]
      %v677 = vld [vmem:[#allocation2 + $0x30] sm:$0xff]
      %v678 = vld [vmem:[#allocation2 + $0x38] sm:$0xff]
      %v679 = vld [vmem:[#allocation2 + $0x40] sm:$0xff]
      %v680 = vld [vmem:[#allocation2 + $0x48] sm:$0xff]
      %v681 = vld [vmem:[#allocation2 + $0x50] sm:$0xff]
      %v682 = vld [vmem:[#allocation2 + $0x58] sm:$0xff]
      %v683 = vpack.c.bf16 %v674, %v671
      %v684 = vpack.c.bf16 %v675, %v672
      %v685 = vpack.c.bf16 %v676, %v673
      %v686 = vpack.c.bf16 %v680, %v677
      %v687 = vpack.c.bf16 %v681, %v678
      %v688 = vpack.c.bf16 %v682, %v679
      %v689 = vld [vmem:[%s7] sm:$0xff]
      %v690 = vld [vmem:[%s7 + $0x8] sm:$0xff]
      %v691 = vld [vmem:[%s7 + $0x10] sm:$0xff]
      %v692 = vld [vmem:[%s7 + $0x18] sm:$0xff]
      %694 = vset.pattern.permute.xlu0 0
      %695 = vperm.xlu0 %694, %v689
      %v696 = vpop.permute.xlu0 %695
      %699 = vset.pattern.permute.xlu0 0
      %700 = vperm.xlu0 %699, %v690
      %v701 = vpop.permute.xlu0 %700
      %704 = vset.pattern.permute.xlu0 0
      %705 = vperm.xlu0 %704, %v691
      %v706 = vpop.permute.xlu0 %705
      %709 = vset.pattern.permute.xlu0 0
      %710 = vperm.xlu0 %709, %v692
      %v711 = vpop.permute.xlu0 %710
      %v717 = vunpack.c.l.b16 %v667
      %v718 = vunpack.c.l.b16 %v668
      %v719 = vunpack.c.l.b16 %v669
      %v720 = vunpack.c.l.b16 %v670
      %v721 = vpack.c.b16 %v718, %v717
      %v722 = vpack.c.b16 %v720, %v719
      %vm723 = vcmask 261120
      %v725 = vsel %vm723, %v721, 0
      %v728 = vsel %vm723, %v722, 0
      %730 = vmatpush.bf16.msra.mxu0 0
      %731 = vmatpush.bf16.msra.mxu0 0
      %732 = vmatpush.bf16.msra.mxu0 0
      %733 = vmatpush.bf16.msra.mxu0 0
      %734 = vmatpush.bf16.msra.mxu0 0
      %735 = vmatpush.bf16.msra.mxu0 0
      %736 = vmatpush.bf16.msra.mxu0 %v686
      %737 = vmatpush.bf16.msra.mxu0 %v683
      %738 = vmatmul.bf16.gmra.mxu0 %v725
      %v739 = vpop.f32.mrf.mxu0
      %v740 = vadd.f32 %v696, %v739
      %v741 = vpop.f32.mrf.mxu0
      %v742 = vadd.f32 %v701, %v741
      %743 = vmatmul.bf16.gmra.mxu0 %v728
      %v744 = vpop.f32.mrf.mxu0
      %v745 = vadd.f32 %v706, %v744
      %v746 = vpop.f32.mrf.mxu0
      %v747 = vadd.f32 %v711, %v746
      %748 = vdwg.mxu0
      %749 = vmatpush.bf16.msra.mxu0 0
      %750 = vmatpush.bf16.msra.mxu0 0
      %751 = vmatpush.bf16.msra.mxu0 0
      %752 = vmatpush.bf16.msra.mxu0 0
      %753 = vmatpush.bf16.msra.mxu0 0
      %754 = vmatpush.bf16.msra.mxu0 0
      %755 = vmatpush.bf16.msra.mxu0 %v687
      %756 = vmatpush.bf16.msra.mxu0 %v684
      %757 = vmatmul.bf16.gmra.mxu0 %v725
      %v758 = vpop.f32.mrf.mxu0
      %v759 = vadd.f32 %v696, %v758
      %v760 = vpop.f32.mrf.mxu0
      %v761 = vadd.f32 %v701, %v760
      %762 = vmatmul.bf16.gmra.mxu0 %v728
      %v763 = vpop.f32.mrf.mxu0
      %v764 = vadd.f32 %v706, %v763
      %v765 = vpop.f32.mrf.mxu0
      %v766 = vadd.f32 %v711, %v765
      %767 = vdwg.mxu0
      %768 = vmatpush.bf16.msra.mxu0 0
      %769 = vmatpush.bf16.msra.mxu0 0
      %770 = vmatpush.bf16.msra.mxu0 0
      %771 = vmatpush.bf16.msra.mxu0 0
      %772 = vmatpush.bf16.msra.mxu0 0
      %773 = vmatpush.bf16.msra.mxu0 0
      %774 = vmatpush.bf16.msra.mxu0 %v688
      %775 = vmatpush.bf16.msra.mxu0 %v685
      %776 = vmatmul.bf16.gmra.mxu0 %v725
      %v777 = vpop.f32.mrf.mxu0
      %v778 = vadd.f32 %v696, %v777
      %v779 = vpop.f32.mrf.mxu0
      %v780 = vadd.f32 %v701, %v779
      %781 = vmatmul.bf16.gmra.mxu0 %v728
      %v782 = vpop.f32.mrf.mxu0
      %v783 = vadd.f32 %v706, %v782
      %v784 = vpop.f32.mrf.mxu0
      %v785 = vadd.f32 %v711, %v784
      %786 = vdwg.mxu0
      %vm787 = vcmp.ge.f32.partialorder %v740, 0.0
      %vm788 = vcmp.ge.f32.partialorder %v759, 0.0
      %vm789 = vcmp.ge.f32.partialorder %v778, 0.0
      %vm790 = vcmp.ge.f32.partialorder %v742, 0.0
      %vm791 = vcmp.ge.f32.partialorder %v761, 0.0
      %vm792 = vcmp.ge.f32.partialorder %v780, 0.0
      %vm793 = vcmp.ge.f32.partialorder %v745, 0.0
      %vm794 = vcmp.ge.f32.partialorder %v764, 0.0
      %vm795 = vcmp.ge.f32.partialorder %v783, 0.0
      %vm796 = vcmp.ge.f32.partialorder %v747, 0.0
      %vm797 = vcmp.ge.f32.partialorder %v766, 0.0
      %vm798 = vcmp.ge.f32.partialorder %v785, 0.0
      %v799 = vmul.f32 %v740, 0.2
      %v800 = vmul.f32 %v759, 0.2
      %v801 = vmul.f32 %v778, 0.2
      %v802 = vmul.f32 %v742, 0.2
      %v803 = vmul.f32 %v761, 0.2
      %v804 = vmul.f32 %v780, 0.2
      %v805 = vmul.f32 %v745, 0.2
      %v806 = vmul.f32 %v764, 0.2
      %v807 = vmul.f32 %v783, 0.2
      %v808 = vmul.f32 %v747, 0.2
      %v809 = vmul.f32 %v766, 0.2
      %v810 = vmul.f32 %v785, 0.2
      %v811 = vsel %vm787, %v740, %v799
      %v812 = vsel %vm788, %v759, %v800
      %v813 = vsel %vm789, %v778, %v801
      %v814 = vsel %vm790, %v742, %v802
      %v815 = vsel %vm791, %v761, %v803
      %v816 = vsel %vm792, %v780, %v804
      %v817 = vsel %vm793, %v745, %v805
      %v818 = vsel %vm794, %v764, %v806
      %v819 = vsel %vm795, %v783, %v807
      %v820 = vsel %vm796, %v747, %v808
      %v821 = vsel %vm797, %v766, %v809
      %v822 = vsel %vm798, %v785, %v810
      %v823 = vmul.f32 %v311, %v811
      %v824 = vmul.f32 %v312, %v812
      %v825 = vmul.f32 %v313, %v813
      %v826 = vmul.f32 %v311, %v814
      %v827 = vmul.f32 %v312, %v815
      %v828 = vmul.f32 %v313, %v816
      %v829 = vmul.f32 %v311, %v817
      %v830 = vmul.f32 %v312, %v818
      %v831 = vmul.f32 %v313, %v819
      %v832 = vmul.f32 %v311, %v820
      %v833 = vmul.f32 %v312, %v821
      %v834 = vmul.f32 %v313, %v822
      %835 = vst [vmem:[#allocation3] sm:$0xff] %v823
      %836 = vst [vmem:[#allocation3 + $0x8] sm:$0xff] %v824
      %837 = vst [vmem:[#allocation3 + $0x10] sm:$0xff] %v825
      %838 = vst [vmem:[#allocation3 + $0x18] sm:$0xff] %v826
      %839 = vst [vmem:[#allocation3 + $0x20] sm:$0xff] %v827
      %840 = vst [vmem:[#allocation3 + $0x28] sm:$0xff] %v828
      %841 = vst [vmem:[#allocation3 + $0x30] sm:$0xff] %v829
      %842 = vst [vmem:[#allocation3 + $0x38] sm:$0xff] %v830
      %843 = vst [vmem:[#allocation3 + $0x40] sm:$0xff] %v831
      %844 = vst [vmem:[#allocation3 + $0x48] sm:$0xff] %v832
      %845 = vst [vmem:[#allocation3 + $0x50] sm:$0xff] %v833
      %846 = vst [vmem:[#allocation3 + $0x58] sm:$0xff] %v834
      %v847 = vld [vmem:[#allocation3] sm:$0xff]
      %v848 = vld [vmem:[#allocation3 + $0x8] sm:$0xff]
      %v849 = vld [vmem:[#allocation3 + $0x10] sm:$0xff]
      %850 = vst [vmem:[#allocation2] sm:$0xff] %v847
      %851 = vst [vmem:[#allocation2 + $0x8] sm:$0xff] %v848
      %852 = vst [vmem:[#allocation2 + $0x10] sm:$0xff] %v849
      %v853 = vld [vmem:[#allocation3] sm:$0xff]
      %v854 = vld [vmem:[#allocation3 + $0x8] sm:$0xff]
      %v855 = vld [vmem:[#allocation3 + $0x10] sm:$0xff]
      %856 = vrot.lane.b32.xlu0 %v853, 127
      %v857 = vpop.permute.xlu0 %856
      %858 = vrot.lane.b32.xlu0 %v854, 127
      %v859 = vpop.permute.xlu0 %858
      %860 = vrot.lane.b32.xlu0 %v855, 127
      %v861 = vpop.permute.xlu0 %860
      %v862 = vsel %vm468, %v859, %v861
      %v863 = vsel %vm468, %v857, %v859
      %v864 = vsel %vm468, %v861, %v857
      %865 = vst [vmem:[#allocation2 + $0x18] sm:$0xff] %v863
      %866 = vst [vmem:[#allocation2 + $0x20] sm:$0xff] %v862
      %867 = vst [vmem:[#allocation2 + $0x28] sm:$0xff] %v864
      %v868 = vld [vmem:[#allocation3 + $0x18] sm:$0xff]
      %v869 = vld [vmem:[#allocation3 + $0x20] sm:$0xff]
      %v870 = vld [vmem:[#allocation3 + $0x28] sm:$0xff]
      %871 = vrot.lane.b32.xlu0 %v868, 1
      %v872 = vpop.permute.xlu0 %871
      %873 = vrot.lane.b32.xlu0 %v869, 1
      %v874 = vpop.permute.xlu0 %873
      %875 = vrot.lane.b32.xlu0 %v870, 1
      %v876 = vpop.permute.xlu0 %875
      %v877 = vsel %vm452, %v874, %v876
      %v878 = vsel %vm452, %v872, %v874
      %v879 = vsel %vm452, %v876, %v872
      %880 = vst [vmem:[#allocation2 + $0x30] sm:$0xff] %v879
      %881 = vst [vmem:[#allocation2 + $0x38] sm:$0xff] %v878
      %882 = vst [vmem:[#allocation2 + $0x40] sm:$0xff] %v877
      %v883 = vld [vmem:[#allocation3 + $0x18] sm:$0xff]
      %v884 = vld [vmem:[#allocation3 + $0x20] sm:$0xff]
      %v885 = vld [vmem:[#allocation3 + $0x28] sm:$0xff]
      %886 = vst [vmem:[#allocation2 + $0x48] sm:$0xff] %v883
      %887 = vst [vmem:[#allocation2 + $0x50] sm:$0xff] %v884
      %888 = vst [vmem:[#allocation2 + $0x58] sm:$0xff] %v885
      %v889 = vld [vmem:[#allocation3] sm:$0xff]
      %v890 = vld [vmem:[#allocation3 + $0x8] sm:$0xff]
      %v891 = vld [vmem:[#allocation3 + $0x10] sm:$0xff]
      %892 = vrot.lane.b32.xlu0 %v889, 110
      %v893 = vpop.permute.xlu0 %892
      %894 = vrot.lane.b32.xlu0 %v890, 110
      %v895 = vpop.permute.xlu0 %894
      %896 = vrot.lane.b32.xlu0 %v891, 110
      %v897 = vpop.permute.xlu0 %896
      %v898 = vsel %vm494, %v895, %v897
      %v899 = vsel %vm494, %v893, %v895
      %v900 = vsel %vm494, %v897, %v893
      %901 = vst [vmem:[#allocation2 + $0x60] sm:$0xff] %v899
      %902 = vst [vmem:[#allocation2 + $0x68] sm:$0xff] %v898
      %903 = vst [vmem:[#allocation2 + $0x70] sm:$0xff] %v900
      %v904 = vld [vmem:[#allocation3] sm:$0xff]
      %v905 = vld [vmem:[#allocation3 + $0x8] sm:$0xff]
      %v906 = vld [vmem:[#allocation3 + $0x10] sm:$0xff]
      %907 = vrot.lane.b32.xlu0 %v904, 109
      %v908 = vpop.permute.xlu0 %907
      %909 = vrot.lane.b32.xlu0 %v905, 109
      %v910 = vpop.permute.xlu0 %909
      %911 = vrot.lane.b32.xlu0 %v906, 109
      %v912 = vpop.permute.xlu0 %911
      %v913 = vsel %vm507, %v910, %v912
      %v914 = vsel %vm507, %v908, %v910
      %v915 = vsel %vm507, %v912, %v908
      %916 = vst [vmem:[#allocation2 + $0x78] sm:$0xff] %v914
      %917 = vst [vmem:[#allocation2 + $0x80] sm:$0xff] %v913
      %918 = vst [vmem:[#allocation2 + $0x88] sm:$0xff] %v915
      %v919 = vld [vmem:[#allocation3 + $0x18] sm:$0xff]
      %v920 = vld [vmem:[#allocation3 + $0x20] sm:$0xff]
      %v921 = vld [vmem:[#allocation3 + $0x28] sm:$0xff]
      %922 = vrot.lane.b32.xlu0 %v919, 111
      %v923 = vpop.permute.xlu0 %922
      %924 = vrot.lane.b32.xlu0 %v920, 111
      %v925 = vpop.permute.xlu0 %924
      %926 = vrot.lane.b32.xlu0 %v921, 111
      %v927 = vpop.permute.xlu0 %926
      %v928 = vsel %vm481, %v925, %v927
      %v929 = vsel %vm481, %v923, %v925
      %v930 = vsel %vm481, %v927, %v923
      %931 = vst [vmem:[#allocation2 + $0x90] sm:$0xff] %v929
      %932 = vst [vmem:[#allocation2 + $0x98] sm:$0xff] %v928
      %933 = vst [vmem:[#allocation2 + $0xa0] sm:$0xff] %v930
      %v934 = vld [vmem:[#allocation3 + $0x18] sm:$0xff]
      %v935 = vld [vmem:[#allocation3 + $0x20] sm:$0xff]
      %v936 = vld [vmem:[#allocation3 + $0x28] sm:$0xff]
      %937 = vrot.lane.b32.xlu0 %v934, 110
      %v938 = vpop.permute.xlu0 %937
      %939 = vrot.lane.b32.xlu0 %v935, 110
      %v940 = vpop.permute.xlu0 %939
      %941 = vrot.lane.b32.xlu0 %v936, 110
      %v942 = vpop.permute.xlu0 %941
      %v943 = vsel %vm494, %v940, %v942
      %v944 = vsel %vm494, %v938, %v940
      %v945 = vsel %vm494, %v942, %v938
      %946 = vst [vmem:[#allocation2 + $0xa8] sm:$0xff] %v944
      %947 = vst [vmem:[#allocation2 + $0xb0] sm:$0xff] %v943
      %948 = vst [vmem:[#allocation2 + $0xb8] sm:$0xff] %v945
      %v949 = vld [vmem:[#allocation3 + $0x30] sm:$0xff]
      %v950 = vld [vmem:[#allocation3 + $0x38] sm:$0xff]
      %v951 = vld [vmem:[#allocation3 + $0x40] sm:$0xff]
      %952 = vrot.lane.b32.xlu0 %v949, 18
      %v953 = vpop.permute.xlu0 %952
      %954 = vrot.lane.b32.xlu0 %v950, 18
      %v955 = vpop.permute.xlu0 %954
      %956 = vrot.lane.b32.xlu0 %v951, 18
      %v957 = vpop.permute.xlu0 %956
      %v958 = vsel %vm426, %v955, %v957
      %v959 = vsel %vm426, %v953, %v955
      %v960 = vsel %vm426, %v957, %v953
      %961 = vst [vmem:[#allocation2 + $0xc0] sm:$0xff] %v960
      %962 = vst [vmem:[#allocation2 + $0xc8] sm:$0xff] %v959
      %963 = vst [vmem:[#allocation2 + $0xd0] sm:$0xff] %v958
      %v964 = vld [vmem:[#allocation3 + $0x30] sm:$0xff]
      %v965 = vld [vmem:[#allocation3 + $0x38] sm:$0xff]
      %v966 = vld [vmem:[#allocation3 + $0x40] sm:$0xff]
      %967 = vrot.lane.b32.xlu0 %v964, 17
      %v968 = vpop.permute.xlu0 %967
      %969 = vrot.lane.b32.xlu0 %v965, 17
      %v970 = vpop.permute.xlu0 %969
      %971 = vrot.lane.b32.xlu0 %v966, 17
      %v972 = vpop.permute.xlu0 %971
      %v973 = vsel %vm439, %v970, %v972
      %v974 = vsel %vm439, %v968, %v970
      %v975 = vsel %vm439, %v972, %v968
      %976 = vst [vmem:[#allocation2 + $0xd8] sm:$0xff] %v975
      %977 = vst [vmem:[#allocation2 + $0xe0] sm:$0xff] %v974
      %978 = vst [vmem:[#allocation2 + $0xe8] sm:$0xff] %v973
      %v979 = vld [vmem:[#allocation3 + $0x48] sm:$0xff]
      %v980 = vld [vmem:[#allocation3 + $0x50] sm:$0xff]
      %v981 = vld [vmem:[#allocation3 + $0x58] sm:$0xff]
      %982 = vrot.lane.b32.xlu0 %v979, 19
      %v983 = vpop.permute.xlu0 %982
      %984 = vrot.lane.b32.xlu0 %v980, 19
      %v985 = vpop.permute.xlu0 %984
      %986 = vrot.lane.b32.xlu0 %v981, 19
      %v987 = vpop.permute.xlu0 %986
      %v988 = vsel %vm413, %v985, %v987
      %v989 = vsel %vm413, %v983, %v985
      %v990 = vsel %vm413, %v987, %v983
      %991 = vst [vmem:[#allocation2 + $0xf0] sm:$0xff] %v990
      %992 = vst [vmem:[#allocation2 + $0xf8] sm:$0xff] %v989
      %993 = vst [vmem:[#allocation2 + $0x100] sm:$0xff] %v988
      %v994 = vld [vmem:[#allocation3 + $0x48] sm:$0xff]
      %v995 = vld [vmem:[#allocation3 + $0x50] sm:$0xff]
      %v996 = vld [vmem:[#allocation3 + $0x58] sm:$0xff]
      %997 = vrot.lane.b32.xlu0 %v994, 18
      %v998 = vpop.permute.xlu0 %997
      %999 = vrot.lane.b32.xlu0 %v995, 18
      %v1000 = vpop.permute.xlu0 %999
      %1001 = vrot.lane.b32.xlu0 %v996, 18
      %v1002 = vpop.permute.xlu0 %1001
      %v1003 = vsel %vm426, %v1000, %v1002
      %v1004 = vsel %vm426, %v998, %v1000
      %v1005 = vsel %vm426, %v1002, %v998
      %1006 = vst [vmem:[#allocation2 + $0x108] sm:$0xff] %v1005
      %1007 = vst [vmem:[#allocation2 + $0x110] sm:$0xff] %v1004
      %1008 = vst [vmem:[#allocation2 + $0x118] sm:$0xff] %v1003
      %v1009 = vld [vmem:[#allocation3 + $0x30] sm:$0xff]
      %v1010 = vld [vmem:[#allocation3 + $0x38] sm:$0xff]
      %v1011 = vld [vmem:[#allocation3 + $0x40] sm:$0xff]
      %1012 = vst [vmem:[#allocation2 + $0x120] sm:$0xff] %v1009
      %1013 = vst [vmem:[#allocation2 + $0x128] sm:$0xff] %v1010
      %1014 = vst [vmem:[#allocation2 + $0x130] sm:$0xff] %v1011
      %v1015 = vld [vmem:[#allocation3 + $0x30] sm:$0xff]
      %v1016 = vld [vmem:[#allocation3 + $0x38] sm:$0xff]
      %v1017 = vld [vmem:[#allocation3 + $0x40] sm:$0xff]
      %1018 = vrot.lane.b32.xlu0 %v1015, 127
      %v1019 = vpop.permute.xlu0 %1018
      %1020 = vrot.lane.b32.xlu0 %v1016, 127
      %v1021 = vpop.permute.xlu0 %1020
      %1022 = vrot.lane.b32.xlu0 %v1017, 127
      %v1023 = vpop.permute.xlu0 %1022
      %v1024 = vsel %vm468, %v1021, %v1023
      %v1025 = vsel %vm468, %v1019, %v1021
      %v1026 = vsel %vm468, %v1023, %v1019
      %1027 = vst [vmem:[#allocation2 + $0x138] sm:$0xff] %v1025
      %1028 = vst [vmem:[#allocation2 + $0x140] sm:$0xff] %v1024
      %1029 = vst [vmem:[#allocation2 + $0x148] sm:$0xff] %v1026
      %v1030 = vld [vmem:[#allocation3 + $0x48] sm:$0xff]
      %v1031 = vld [vmem:[#allocation3 + $0x50] sm:$0xff]
      %v1032 = vld [vmem:[#allocation3 + $0x58] sm:$0xff]
      %1033 = vrot.lane.b32.xlu0 %v1030, 1
      %v1034 = vpop.permute.xlu0 %1033
      %1035 = vrot.lane.b32.xlu0 %v1031, 1
      %v1036 = vpop.permute.xlu0 %1035
      %1037 = vrot.lane.b32.xlu0 %v1032, 1
      %v1038 = vpop.permute.xlu0 %1037
      %v1039 = vsel %vm452, %v1036, %v1038
      %v1040 = vsel %vm452, %v1034, %v1036
      %v1041 = vsel %vm452, %v1038, %v1034
      %1042 = vst [vmem:[#allocation2 + $0x150] sm:$0xff] %v1041
      %1043 = vst [vmem:[#allocation2 + $0x158] sm:$0xff] %v1040
      %1044 = vst [vmem:[#allocation2 + $0x160] sm:$0xff] %v1039
      %v1045 = vld [vmem:[#allocation3 + $0x48] sm:$0xff]
      %v1046 = vld [vmem:[#allocation3 + $0x50] sm:$0xff]
      %v1047 = vld [vmem:[#allocation3 + $0x58] sm:$0xff]
      %1048 = vst [vmem:[#allocation2 + $0x168] sm:$0xff] %v1045
      %1049 = vst [vmem:[#allocation2 + $0x170] sm:$0xff] %v1046
      %1050 = vst [vmem:[#allocation2 + $0x178] sm:$0xff] %v1047
      %v1051 = vld [vmem:[%s5] sm:$0xf]
      %v1052 = vld [vmem:[%s5 + $0x4] sm:$0xf]
      %v1053 = vld [vmem:[%s5 + $0x8] sm:$0xf]
      %v1054 = vld [vmem:[%s5 + $0xc] sm:$0xf]
      %v1055 = vld [vmem:[#allocation2] sm:$0xff]
      %v1056 = vld [vmem:[#allocation2 + $0x8] sm:$0xff]
      %v1057 = vld [vmem:[#allocation2 + $0x10] sm:$0xff]
      %v1058 = vld [vmem:[#allocation2 + $0x18] sm:$0xff]
      %v1059 = vld [vmem:[#allocation2 + $0x20] sm:$0xff]
      %v1060 = vld [vmem:[#allocation2 + $0x28] sm:$0xff]
      %v1061 = vld [vmem:[#allocation2 + $0x30] sm:$0xff]
      %v1062 = vld [vmem:[#allocation2 + $0x38] sm:$0xff]
      %v1063 = vld [vmem:[#allocation2 + $0x40] sm:$0xff]
      %v1064 = vld [vmem:[#allocation2 + $0x48] sm:$0xff]
      %v1065 = vld [vmem:[#allocation2 + $0x50] sm:$0xff]
      %v1066 = vld [vmem:[#allocation2 + $0x58] sm:$0xff]
      %v1067 = vld [vmem:[#allocation2 + $0x60] sm:$0xff]
      %v1068 = vld [vmem:[#allocation2 + $0x68] sm:$0xff]
      %v1069 = vld [vmem:[#allocation2 + $0x70] sm:$0xff]
      %v1070 = vld [vmem:[#allocation2 + $0x78] sm:$0xff]
      %v1071 = vld [vmem:[#allocation2 + $0x80] sm:$0xff]
      %v1072 = vld [vmem:[#allocation2 + $0x88] sm:$0xff]
      %v1073 = vld [vmem:[#allocation2 + $0x90] sm:$0xff]
      %v1074 = vld [vmem:[#allocation2 + $0x98] sm:$0xff]
      %v1075 = vld [vmem:[#allocation2 + $0xa0] sm:$0xff]
      %v1076 = vld [vmem:[#allocation2 + $0xa8] sm:$0xff]
      %v1077 = vld [vmem:[#allocation2 + $0xb0] sm:$0xff]
      %v1078 = vld [vmem:[#allocation2 + $0xb8] sm:$0xff]
      %v1079 = vld [vmem:[#allocation2 + $0xc0] sm:$0xff]
      %v1080 = vld [vmem:[#allocation2 + $0xc8] sm:$0xff]
      %v1081 = vld [vmem:[#allocation2 + $0xd0] sm:$0xff]
      %v1082 = vld [vmem:[#allocation2 + $0xd8] sm:$0xff]
      %v1083 = vld [vmem:[#allocation2 + $0xe0] sm:$0xff]
      %v1084 = vld [vmem:[#allocation2 + $0xe8] sm:$0xff]
      %v1085 = vld [vmem:[#allocation2 + $0xf0] sm:$0xff]
      %v1086 = vld [vmem:[#allocation2 + $0xf8] sm:$0xff]
      %v1087 = vld [vmem:[#allocation2 + $0x100] sm:$0xff]
      %v1088 = vld [vmem:[#allocation2 + $0x108] sm:$0xff]
      %v1089 = vld [vmem:[#allocation2 + $0x110] sm:$0xff]
      %v1090 = vld [vmem:[#allocation2 + $0x118] sm:$0xff]
      %v1091 = vld [vmem:[#allocation2 + $0x120] sm:$0xff]
      %v1092 = vld [vmem:[#allocation2 + $0x128] sm:$0xff]
      %v1093 = vld [vmem:[#allocation2 + $0x130] sm:$0xff]
      %v1094 = vld [vmem:[#allocation2 + $0x138] sm:$0xff]
      %v1095 = vld [vmem:[#allocation2 + $0x140] sm:$0xff]
      %v1096 = vld [vmem:[#allocation2 + $0x148] sm:$0xff]
      %v1097 = vld [vmem:[#allocation2 + $0x150] sm:$0xff]
      %v1098 = vld [vmem:[#allocation2 + $0x158] sm:$0xff]
      %v1099 = vld [vmem:[#allocation2 + $0x160] sm:$0xff]
      %v1100 = vld [vmem:[#allocation2 + $0x168] sm:$0xff]
      %v1101 = vld [vmem:[#allocation2 + $0x170] sm:$0xff]
      %v1102 = vld [vmem:[#allocation2 + $0x178] sm:$0xff]
      %v1103 = vpack.c.bf16 %v1058, %v1055
      %v1104 = vpack.c.bf16 %v1059, %v1056
      %v1105 = vpack.c.bf16 %v1060, %v1057
      %v1106 = vpack.c.bf16 %v1064, %v1061
      %v1107 = vpack.c.bf16 %v1065, %v1062
      %v1108 = vpack.c.bf16 %v1066, %v1063
      %v1109 = vpack.c.bf16 %v1070, %v1067
      %v1110 = vpack.c.bf16 %v1071, %v1068
      %v1111 = vpack.c.bf16 %v1072, %v1069
      %v1112 = vpack.c.bf16 %v1076, %v1073
      %v1113 = vpack.c.bf16 %v1077, %v1074
      %v1114 = vpack.c.bf16 %v1078, %v1075
      %v1115 = vpack.c.bf16 %v1082, %v1079
      %v1116 = vpack.c.bf16 %v1083, %v1080
      %v1117 = vpack.c.bf16 %v1084, %v1081
      %v1118 = vpack.c.bf16 %v1088, %v1085
      %v1119 = vpack.c.bf16 %v1089, %v1086
      %v1120 = vpack.c.bf16 %v1090, %v1087
      %v1121 = vpack.c.bf16 %v1094, %v1091
      %v1122 = vpack.c.bf16 %v1095, %v1092
      %v1123 = vpack.c.bf16 %v1096, %v1093
      %v1124 = vpack.c.bf16 %v1100, %v1097
      %v1125 = vpack.c.bf16 %v1101, %v1098
      %v1126 = vpack.c.bf16 %v1102, %v1099
      %v1127 = vld [vmem:[%s7] sm:$0xff]
      %v1128 = vld [vmem:[%s7 + $0x8] sm:$0xff]
      %v1129 = vld [vmem:[%s7 + $0x10] sm:$0xff]
      %v1130 = vld [vmem:[%s7 + $0x18] sm:$0xff]
      %1132 = vset.pattern.permute.xlu0 1
      %1133 = vperm.xlu0 %1132, %v1127
      %v1134 = vpop.permute.xlu0 %1133
      %1137 = vset.pattern.permute.xlu0 1
      %1138 = vperm.xlu0 %1137, %v1128
      %v1139 = vpop.permute.xlu0 %1138
      %1142 = vset.pattern.permute.xlu0 1
      %1143 = vperm.xlu0 %1142, %v1129
      %v1144 = vpop.permute.xlu0 %1143
      %1147 = vset.pattern.permute.xlu0 1
      %1148 = vperm.xlu0 %1147, %v1130
      %v1149 = vpop.permute.xlu0 %1148
      %v1155 = vunpack.c.l.b16 %v1051
      %v1156 = vunpack.c.l.b16 %v1052
      %v1157 = vunpack.c.l.b16 %v1053
      %v1158 = vunpack.c.l.b16 %v1054
      %v1159 = vpack.c.b16 %v1156, %v1155
      %v1160 = vpack.c.b16 %v1158, %v1157
      %1163 = vmatpush.bf16.msra.mxu0 %v1124
      %1164 = vmatpush.bf16.msra.mxu0 %v1121
      %1165 = vmatpush.bf16.msra.mxu0 %v1118
      %1166 = vmatpush.bf16.msra.mxu0 %v1115
      %1167 = vmatpush.bf16.msra.mxu0 %v1112
      %1168 = vmatpush.bf16.msra.mxu0 %v1109
      %1169 = vmatpush.bf16.msra.mxu0 %v1106
      %1170 = vmatpush.bf16.msra.mxu0 %v1103
      %1171 = vmatmul.bf16.gmra.mxu0 %v1159
      %v1172 = vpop.f32.mrf.mxu0
      %v1173 = vadd.f32 %v1134, %v1172
      %v1174 = vpop.f32.mrf.mxu0
      %v1175 = vadd.f32 %v1139, %v1174
      %1176 = vmatmul.bf16.gmra.mxu0 %v1160
      %v1177 = vpop.f32.mrf.mxu0
      %v1178 = vadd.f32 %v1144, %v1177
      %v1179 = vpop.f32.mrf.mxu0
      %v1180 = vadd.f32 %v1149, %v1179
      %1181 = vdwg.mxu0
      %1182 = vmatpush.bf16.msra.mxu0 %v1125
      %1183 = vmatpush.bf16.msra.mxu0 %v1122
      %1184 = vmatpush.bf16.msra.mxu0 %v1119
      %1185 = vmatpush.bf16.msra.mxu0 %v1116
      %1186 = vmatpush.bf16.msra.mxu0 %v1113
      %1187 = vmatpush.bf16.msra.mxu0 %v1110
      %1188 = vmatpush.bf16.msra.mxu0 %v1107
      %1189 = vmatpush.bf16.msra.mxu0 %v1104
      %1190 = vmatmul.bf16.gmra.mxu0 %v1159
      %v1191 = vpop.f32.mrf.mxu0
      %v1192 = vadd.f32 %v1134, %v1191
      %v1193 = vpop.f32.mrf.mxu0
      %v1194 = vadd.f32 %v1139, %v1193
      %1195 = vmatmul.bf16.gmra.mxu0 %v1160
      %v1196 = vpop.f32.mrf.mxu0
      %v1197 = vadd.f32 %v1144, %v1196
      %v1198 = vpop.f32.mrf.mxu0
      %v1199 = vadd.f32 %v1149, %v1198
      %1200 = vdwg.mxu0
      %1201 = vmatpush.bf16.msra.mxu0 %v1126
      %1202 = vmatpush.bf16.msra.mxu0 %v1123
      %1203 = vmatpush.bf16.msra.mxu0 %v1120
      %1204 = vmatpush.bf16.msra.mxu0 %v1117
      %1205 = vmatpush.bf16.msra.mxu0 %v1114
      %1206 = vmatpush.bf16.msra.mxu0 %v1111
      %1207 = vmatpush.bf16.msra.mxu0 %v1108
      %1208 = vmatpush.bf16.msra.mxu0 %v1105
      %1209 = vmatmul.bf16.gmra.mxu0 %v1159
      %v1210 = vpop.f32.mrf.mxu0
      %v1211 = vadd.f32 %v1134, %v1210
      %v1212 = vpop.f32.mrf.mxu0
      %v1213 = vadd.f32 %v1139, %v1212
      %1214 = vmatmul.bf16.gmra.mxu0 %v1160
      %v1215 = vpop.f32.mrf.mxu0
      %v1216 = vadd.f32 %v1144, %v1215
      %v1217 = vpop.f32.mrf.mxu0
      %v1218 = vadd.f32 %v1149, %v1217
      %1219 = vdwg.mxu0
      %vm1220 = vcmp.ge.f32.partialorder %v1173, 0.0
      %vm1221 = vcmp.ge.f32.partialorder %v1192, 0.0
      %vm1222 = vcmp.ge.f32.partialorder %v1211, 0.0
      %vm1223 = vcmp.ge.f32.partialorder %v1175, 0.0
      %vm1224 = vcmp.ge.f32.partialorder %v1194, 0.0
      %vm1225 = vcmp.ge.f32.partialorder %v1213, 0.0
      %vm1226 = vcmp.ge.f32.partialorder %v1178, 0.0
      %vm1227 = vcmp.ge.f32.partialorder %v1197, 0.0
      %vm1228 = vcmp.ge.f32.partialorder %v1216, 0.0
      %vm1229 = vcmp.ge.f32.partialorder %v1180, 0.0
      %vm1230 = vcmp.ge.f32.partialorder %v1199, 0.0
      %vm1231 = vcmp.ge.f32.partialorder %v1218, 0.0
      %v1232 = vmul.f32 %v1173, 0.2
      %v1233 = vmul.f32 %v1192, 0.2
      %v1234 = vmul.f32 %v1211, 0.2
      %v1235 = vmul.f32 %v1175, 0.2
      %v1236 = vmul.f32 %v1194, 0.2
      %v1237 = vmul.f32 %v1213, 0.2
      %v1238 = vmul.f32 %v1178, 0.2
      %v1239 = vmul.f32 %v1197, 0.2
      %v1240 = vmul.f32 %v1216, 0.2
      %v1241 = vmul.f32 %v1180, 0.2
      %v1242 = vmul.f32 %v1199, 0.2
      %v1243 = vmul.f32 %v1218, 0.2
      %v1244 = vsel %vm1220, %v1173, %v1232
      %v1245 = vsel %vm1221, %v1192, %v1233
      %v1246 = vsel %vm1222, %v1211, %v1234
      %v1247 = vsel %vm1223, %v1175, %v1235
      %v1248 = vsel %vm1224, %v1194, %v1236
      %v1249 = vsel %vm1225, %v1213, %v1237
      %v1250 = vsel %vm1226, %v1178, %v1238
      %v1251 = vsel %vm1227, %v1197, %v1239
      %v1252 = vsel %vm1228, %v1216, %v1240
      %v1253 = vsel %vm1229, %v1180, %v1241
      %v1254 = vsel %vm1230, %v1199, %v1242
      %v1255 = vsel %vm1231, %v1218, %v1243
      %1256 = vst [vmem:[%s307] sm:$0xff] %v1244
      %1257 = vst [vmem:[%s307 + $0x8] sm:$0xff] %v1245
      %1258 = vst [vmem:[%s307 + $0x10] sm:$0xff] %v1246
      %1259 = vst [vmem:[%s307 + $0x18] sm:$0xff] %v1247
      %1260 = vst [vmem:[%s307 + $0x20] sm:$0xff] %v1248
      %1261 = vst [vmem:[%s307 + $0x28] sm:$0xff] %v1249
      %1262 = vst [vmem:[%s307 + $0x30] sm:$0xff] %v1250
      %1263 = vst [vmem:[%s307 + $0x38] sm:$0xff] %v1251
      %1264 = vst [vmem:[%s307 + $0x40] sm:$0xff] %v1252
      %1265 = vst [vmem:[%s307 + $0x48] sm:$0xff] %v1253
      %1266 = vst [vmem:[%s307 + $0x50] sm:$0xff] %v1254
      %1267 = vst [vmem:[%s307 + $0x58] sm:$0xff] %v1255
      %p1268 = scmp.lt.s32.totalorder %s19, 1
      %s1269 = scalar_select %p1268, %s19, 1
      %s1270 = smul.addr %s1269, 12
      %s1271 = smul.addr %s1270, 8
      %s1272 = scalar_lea.vmem %s8, %s1271
      // Predicated region
      $region53: #{upsample_layer_forward.1} parent=51 // pred_check
        %p1273 = pneg %p210
      $region54: #{upsample_layer_forward.1} parent=51 // pred_check_branch
        %1275 = sbr.rel (%p1273) target = $region56
      $region55: #{upsample_layer_forward.1} parent=51 // pred_region
        _
      $region56: #{upsample_layer_forward.1} parent=51 // pred_fallthru
        _
    $region52: #{upsample_layer_forward.1} parent=5 // pred_fallthru
      _
    %p1276 = scmp.le.s32.totalorder 2, %s14
    // Predicated region
    $region57: #{upsample_layer_forward.1} parent=5 // pred_check
      %p1277 = pneg %p1276
    $region58: #{upsample_layer_forward.1} parent=5 // pred_check_branch
      %1279 = sbr.rel (%p1277) target = $region60
    $region59: #{upsample_layer_forward.1} parent=5 // pred_region
      %s1280 = ssub.s32 %s14, 2
      // Predicated region
      $region61: #{upsample_layer_forward.1} parent=59 // pred_check
        %p1281 = pneg %p216
      $region62: #{upsample_layer_forward.1} parent=59 // pred_check_branch
        %1283 = sbr.rel (%p1281) target = $region64
      $region63: #{upsample_layer_forward.1} parent=59 // pred_region
        %p1284 = scmp.lt.s32.totalorder %s20, 1
        %s1285 = scalar_select %p1284, %s20, 1
        %s1286 = smul.addr %s1285, 12
        %s1287 = smul.addr %s1286, 8
        %s1288 = scalar_lea.vmem %s8, %s1287
      $region64: #{upsample_layer_forward.1} parent=59 // pred_fallthru
        _
    $region60: #{upsample_layer_forward.1} parent=5 // pred_fallthru
      _
  $region6: #{upsample_layer_forward.1} parent=0 // loop_footer
    %s18 = sadd.s32 1, %s14
  $region7: #{upsample_layer_forward.1} parent=0 // loop_footer_branch
    %13 = sbr.rel target = $region3
  $region8: #{upsample_layer_forward.1} parent=0 // loop_exit
    _

</llo_original>
